<compile_context>
chip_gen: v6e
topology: v6e:2x2x1
jax: 0.10.0
libtpu: 0.0.40
codegen_flags: <defaults>
</compile_context>

<pallas_src>
import jax
import jax.numpy as jnp
from jax.experimental import pallas as pl
from jax.experimental.pallas import tpu as pltpu

# ---------------- small synthetic "roberta-base"-shaped config ----------------
VOCAB = 100            # synthetic vocab (real roberta-base: 50265)
MAX_POS = 32
B, S, H = 2, 8, 128    # batch, seq, hidden (lane-dense; real roberta-base: H=768)
NH = 4                 # attention heads (real: 12)
HD = H // NH
FF = 512               # intermediate = 4*H, lane-dense (real: 3072)
NLAYERS = 2            # encoder layers (real: 12)
DROPOUT_P = 0.3
LN_EPS = 1e-5
T = B * S              # flattened token count

BATCH_TILE = 1         # sequences per grid step (batch-parallel axis for v7x megacore)
B_TILES = B // BATCH_TILE
TT = BATCH_TILE * S    # tokens per grid step
VP = max(3 * H, FF)    # lane width of the packed per-layer vector block


# ------------------------------ kernel helpers --------------------------------
def _layer_norm(x, gamma, beta):
    mu = jnp.mean(x, axis=-1, keepdims=True)
    var = jnp.mean((x - mu) ** 2, axis=-1, keepdims=True)
    return (x - mu) * jax.lax.rsqrt(var + LN_EPS) * gamma + beta


def _gelu(x):
    # TODO(synk): HF roberta uses exact erf GELU; tanh approx keeps the
    # transcendental on the EUP and avoids relying on an erf lowering.
    return 0.5 * x * (1.0 + jnp.tanh(0.7978845608028654 * (x + 0.044715 * x * x * x)))


def _bf16(x):
    return x.astype(jnp.bfloat16)


def _pick_vmem_limit():
    # ~75% of physical VMEM, capped: ≈48 MiB on v7x (64 MiB), ≈96 MiB on v5e/v6e.
    try:
        cap = pltpu.get_tpu_info().vmem_capacity_bytes
    except Exception:
        cap = 64 * 1024 * 1024
    return int(min(cap * 3 // 4, 100 * 1024 * 1024))


# ----------------------------- fused encoder kernel ---------------------------
def rd_encoder_kernel(x_emb_ref, emb_ln_ref, wqkv_ref, wo_ref, w1_ref, w2_ref,
                      vec_ref, out_ref, act_ref):
    l = pl.program_id(1)

    # Packed per-layer vectors (one DMA): rows =
    #   0 bqkv(head-major) | 1 bo | 2 ln1_g | 3 ln1_b | 4 b1 | 5 b2 | 6 ln2_g | 7 ln2_b
    vec = vec_ref[0]                                    # (8, VP) f32
    bqkv  = vec[0:1, :3 * H]
    bo    = vec[1:2, :H]
    ln1_g = vec[2:3, :H]
    ln1_b = vec[3:4, :H]
    b1    = vec[4:5, :FF]
    b2    = vec[5:6, :H]
    ln2_g = vec[6:7, :H]
    ln2_b = vec[7:8, :H]

    # Layer 0: embedding LayerNorm initializes the bf16 carried activation.
    @pl.when(l == 0)
    def _():
        act_ref[...] = _bf16(_layer_norm(x_emb_ref[...],
                                         emb_ln_ref[0:1, :], emb_ln_ref[1:2, :]))

    x = act_ref[...]                                    # (TT, H) bf16 carry

    # ---- fused QKV projection: one (TT,H) x (H,3H) bf16 MXU matmul ----
    qkv = jnp.dot(x, wqkv_ref[0], preferred_element_type=jnp.float32) + bqkv
    # Lanes are head-major ([head][q|k|v][HD]) -> a single sublane transpose puts
    # heads on the batch dim; no per-tensor q/k/v transposes.
    qkv_g = (qkv.reshape(BATCH_TILE, S, NH, 3 * HD)
                .transpose(0, 2, 1, 3)
                .reshape(BATCH_TILE * NH, S, 3 * HD))
    q = qkv_g[..., 0 * HD:1 * HD] * (1.0 / (HD ** 0.5))  # fold softmax scale into q
    k = qkv_g[..., 1 * HD:2 * HD]
    v = qkv_g[..., 2 * HD:3 * HD]

    # ---- head-batched attention (single leading batch dim g = BATCH_TILE*NH) ----
    scores = jnp.einsum('gqd,gkd->gqk', _bf16(q), _bf16(k),
                        preferred_element_type=jnp.float32)          # (g,S,S)
    scores = scores - jnp.max(scores, axis=-1, keepdims=True)
    p = jnp.exp(scores)
    p = p * pl.reciprocal(jnp.sum(p, axis=-1, keepdims=True), approx=True)

    ctx = jnp.einsum('gqk,gkd->gqd', _bf16(p), _bf16(v),
                     preferred_element_type=jnp.float32)             # (g,S,HD)
    ctx = (ctx.reshape(BATCH_TILE, NH, S, HD)
              .transpose(0, 2, 1, 3)
              .reshape(TT, H))                                       # contiguous flatten

    attn_out = jnp.dot(_bf16(ctx), wo_ref[0],
                       preferred_element_type=jnp.float32) + bo
    x1 = _layer_norm(x + attn_out, ln1_g, ln1_b)                     # f32

    # ---- feed-forward ----
    ff = _gelu(jnp.dot(_bf16(x1), w1_ref[0],
                       preferred_element_type=jnp.float32) + b1)
    ff_out = jnp.dot(_bf16(ff), w2_ref[0],
                     preferred_element_type=jnp.float32) + b2
    x2 = _layer_norm(x1 + ff_out, ln2_g, ln2_b)                      # f32

    act_ref[...] = _bf16(x2)                                         # carry to next layer

    # Last layer: emit the per-batch-tile encoder output (lane-dense f32 store).
    @pl.when(l == pl.num_programs(1) - 1)
    def _():
        out_ref[...] = x2


# ------------------------- pooler + dropout kernel -----------------------------
def rd_pooler_kernel(cls_ref, pw_ref, pb_ref, keep_ref, out_ref):
    pooled = jnp.tanh(jnp.dot(_bf16(cls_ref[...]), pw_ref[...],
                              preferred_element_type=jnp.float32) + pb_ref[...])
    out_ref[...] = pooled * keep_ref[...]        # keep_ref is 0 or 1/(1-p) (train mode)


# ------------------------------- parameter init --------------------------------
def init_params(key):
    keys = iter(jax.random.split(key, 4 + NLAYERS * 6))

    def dense_w(fi, fo):
        return 0.02 * jax.random.normal(next(keys), (fi, fo), jnp.float32)

    params = {
        'word_emb': 0.02 * jax.random.normal(next(keys), (VOCAB, H), jnp.float32),
        'pos_emb':  0.02 * jax.random.normal(next(keys), (MAX_POS, H), jnp.float32),
        'type_emb': 0.02 * jax.random.normal(next(keys), (1, H), jnp.float32),
        'emb_ln':   jnp.concatenate([jnp.ones((1, H), jnp.float32),     # gamma
                                     jnp.zeros((1, H), jnp.float32)]),  # beta
        'pool_w':   dense_w(H, H).astype(jnp.bfloat16),                 # bf16 in HBM
        'pool_b':   jnp.zeros((1, H), jnp.float32),
    }

    wqkv, wo, w1, w2, vecs = [], [], [], [], []
    for _ in range(NLAYERS):
        wq, wk, wv = dense_w(H, H), dense_w(H, H), dense_w(H, H)
        # Fuse QKV head-major: output lanes ordered (head, [q|k|v], HD).
        wqkv.append(jnp.stack([wq.reshape(H, NH, HD),
                               wk.reshape(H, NH, HD),
                               wv.reshape(H, NH, HD)], axis=2).reshape(H, 3 * H))
        wo.append(dense_w(H, H))
        w1.append(dense_w(H, FF))
        w2.append(dense_w(FF, H))
        # Packed per-layer vector block. Biases are zero; LN gammas are ones.
        # (bqkv row must follow the same head-major order as wqkv if non-zero.)
        vec = jnp.zeros((8, VP), jnp.float32)
        vec = vec.at[2, :H].set(1.0)   # ln1_gamma
        vec = vec.at[6, :H].set(1.0)   # ln2_gamma
        vecs.append(vec)

    params.update({
        'wqkv': jnp.stack(wqkv).astype(jnp.bfloat16),   # (L, H, 3H) bf16
        'wo':   jnp.stack(wo).astype(jnp.bfloat16),     # (L, H, H)  bf16
        'w1':   jnp.stack(w1).astype(jnp.bfloat16),     # (L, H, FF) bf16
        'w2':   jnp.stack(w2).astype(jnp.bfloat16),     # (L, FF, H) bf16
        'layer_vecs': jnp.stack(vecs),                  # (L, 8, VP) f32
    })
    return params


# --------------------------------- forward pass --------------------------------
def _per_layer(shape):
    return pl.BlockSpec((1,) + shape, lambda b, l: (l, 0, 0))


@jax.jit
def rd_model_forward(input_ids, params, dropout_seed):
    # ---- embeddings (data-dependent gather stays in JAX glue) ----
    word = jnp.take(params['word_emb'], input_ids, axis=0)            # (B, S, H)
    pos = params['pos_emb'][2:2 + S][None, :, :]                      # RoBERTa: positions start at padding_idx+1=2
    x = word + pos + params['type_emb'][0][None, None, :]
    x2d = x.reshape(T, H)

    # Training-mode dropout(0.3) keep-mask, pre-scaled by 1/(1-p), built in glue.
    keep = jax.random.bernoulli(jax.random.PRNGKey(dropout_seed),
                                1.0 - DROPOUT_P, (B, H))
    keep_scale = keep.astype(jnp.float32) * (1.0 / (1.0 - DROPOUT_P))

    vmem_limit = _pick_vmem_limit()

    # ---- fused encoder: grid = (batch tiles [parallel], layers [carried]) ----
    enc_grid = pltpu.PrefetchScalarGridSpec(
        num_scalar_prefetch=0,
        grid=(B_TILES, NLAYERS),
        in_specs=[
            pl.BlockSpec((TT, H), lambda b, l: (b, 0)),   # embeddings (per batch tile)
            pl.BlockSpec((2, H), lambda b, l: (0, 0)),    # emb LN gamma/beta
            _per_layer((H, 3 * H)),                       # wqkv  (bf16)
            _per_layer((H, H)),                           # wo    (bf16)
            _per_layer((H, FF)),                          # w1    (bf16)
            _per_layer((FF, H)),                          # w2    (bf16)
            _per_layer((8, VP)),                          # packed biases / LN vectors
        ],
        out_specs=pl.BlockSpec((TT, H), lambda b, l: (b, 0)),
        scratch_shapes=[pltpu.VMEM((TT, H), jnp.bfloat16)],   # bf16 carried activation
    )

    enc_out = pl.pallas_call(
        rd_encoder_kernel,
        out_shape=jax.ShapeDtypeStruct((T, H), jnp.float32),
        grid_spec=enc_grid,
        compiler_params=pltpu.CompilerParams(
            dimension_semantics=("parallel", "arbitrary"),
            vmem_limit_bytes=vmem_limit),
    )(x2d, params['emb_ln'], params['wqkv'], params['wo'],
      params['w1'], params['w2'], params['layer_vecs'])

    # ---- pooler (dense + tanh on [CLS]) + dropout as a separate tiny kernel ----
    cls = enc_out.reshape(B, S, H)[:, 0, :]                            # (B, H)
    pooled = pl.pallas_call(
        rd_pooler_kernel,
        out_shape=jax.ShapeDtypeStruct((B, H), jnp.float32),
        grid_spec=pltpu.PrefetchScalarGridSpec(
            num_scalar_prefetch=0, grid=(1,),
            in_specs=[pl.BlockSpec((B, H), lambda i: (0, 0)),
                      pl.BlockSpec((H, H), lambda i: (0, 0)),
                      pl.BlockSpec((1, H), lambda i: (0, 0)),
                      pl.BlockSpec((B, H), lambda i: (0, 0))],
            out_specs=pl.BlockSpec((B, H), lambda i: (0, 0))),
        compiler_params=pltpu.CompilerParams(
            dimension_semantics=("arbitrary",),
            vmem_limit_bytes=vmem_limit),
    )(cls, params['pool_w'], params['pool_b'], keep_scale)
    return pooled


# ------------------------------------ main --------------------------------------
if __name__ == "__main__":
    key = jax.random.PRNGKey(0)
    pkey, dkey = jax.random.split(key)
    params = init_params(pkey)
    input_ids = jax.random.randint(dkey, (B, S), 3, VOCAB, dtype=jnp.int32)

    out = rd_model_forward(input_ids, params, 1234)
    out = jax.block_until_ready(out)
    assert out.shape == (B, H) and out.dtype == jnp.float32
    assert bool(jnp.all(jnp.isfinite(out)))
    print("KERNEL_OK")
</pallas_src>

<mosaic_0001>
module attributes {stable_mosaic.version = 11 : i64} {
  func.func @rd_encoder_kernel(%arg0: i32, %arg1: i32, %arg2: memref<8x128xf32, #tpu.memory_space<vmem>>, %arg3: memref<2x128xf32, #tpu.memory_space<vmem>>, %arg4: memref<1x128x384xbf16, #tpu.memory_space<vmem>>, %arg5: memref<1x128x128xbf16, #tpu.memory_space<vmem>>, %arg6: memref<1x128x512xbf16, #tpu.memory_space<vmem>>, %arg7: memref<1x512x128xbf16, #tpu.memory_space<vmem>>, %arg8: memref<1x8x512xf32, #tpu.memory_space<vmem>>, %arg9: memref<8x128xf32, #tpu.memory_space<vmem>>, %arg10: memref<8x128xbf16, #tpu.memory_space<vmem>>) attributes {dimension_semantics = [#tpu.dimension_semantics<parallel>, #tpu.dimension_semantics<arbitrary>], iteration_bounds = array<i64: 2, 2>, scalar_prefetch = 0 : i64, scratch_operands = 1 : i64, tpu.core_type = #tpu.core_type<tc>, window_params = [{transform_indices = @transform_0, window_bounds = array<i64: 8, 128>}, {pipeline_mode = #tpu.pipeline_mode<synchronous>, transform_indices = @transform_1, window_bounds = array<i64: 2, 128>}, {transform_indices = @transform_2, window_bounds = array<i64: 1, 128, 384>}, {transform_indices = @transform_3, window_bounds = array<i64: 1, 128, 128>}, {transform_indices = @transform_4, window_bounds = array<i64: 1, 128, 512>}, {transform_indices = @transform_5, window_bounds = array<i64: 1, 512, 128>}, {transform_indices = @transform_6, window_bounds = array<i64: 1, 8, 512>}, {transform_indices = @transform_7, window_bounds = array<i64: 8, 128>}]} {
    %c0 = arith.constant 0 : index
    %c0_0 = arith.constant 0 : index
    %c0_1 = arith.constant 0 : index
    %0 = vector.load %arg8[%c0, %c0_0, %c0_1] : memref<1x8x512xf32, #tpu.memory_space<vmem>>, vector<1x8x512xf32>
    %1 = vector.shape_cast %0 : vector<1x8x512xf32> to vector<8x512xf32>
    %2 = vector.extract_strided_slice %1 {offsets = [0, 0], sizes = [1, 384], strides = [1, 1]} : vector<8x512xf32> to vector<1x384xf32>
    %3 = vector.extract_strided_slice %1 {offsets = [1, 0], sizes = [1, 128], strides = [1, 1]} : vector<8x512xf32> to vector<1x128xf32>
    %4 = vector.extract_strided_slice %1 {offsets = [2, 0], sizes = [1, 128], strides = [1, 1]} : vector<8x512xf32> to vector<1x128xf32>
    %5 = vector.extract_strided_slice %1 {offsets = [3, 0], sizes = [1, 128], strides = [1, 1]} : vector<8x512xf32> to vector<1x128xf32>
    %6 = vector.extract_strided_slice %1 {offsets = [4, 0], sizes = [1, 512], strides = [1, 1]} : vector<8x512xf32> to vector<1x512xf32>
    %7 = vector.extract_strided_slice %1 {offsets = [5, 0], sizes = [1, 128], strides = [1, 1]} : vector<8x512xf32> to vector<1x128xf32>
    %8 = vector.extract_strided_slice %1 {offsets = [6, 0], sizes = [1, 128], strides = [1, 1]} : vector<8x512xf32> to vector<1x128xf32>
    %9 = vector.extract_strided_slice %1 {offsets = [7, 0], sizes = [1, 128], strides = [1, 1]} : vector<8x512xf32> to vector<1x128xf32>
    %c0_i32 = arith.constant 0 : i32
    %10 = arith.cmpi eq, %arg1, %c0_i32 : i32
    %11 = arith.extui %10 : i1 to i32
    %c0_i32_2 = arith.constant 0 : i32
    %12 = arith.cmpi ne, %11, %c0_i32_2 : i32
    scf.if %12 {
      %c0_42 = arith.constant 0 : index
      %c0_43 = arith.constant 0 : index
      %129 = vector.load %arg2[%c0_42, %c0_43] : memref<8x128xf32, #tpu.memory_space<vmem>>, vector<8x128xf32>
      %c0_44 = arith.constant 0 : index
      %c0_45 = arith.constant 0 : index
      %130 = vector.load %arg3[%c0_44, %c0_45] : memref<2x128xf32, #tpu.memory_space<vmem>>, vector<1x128xf32>
      %c1 = arith.constant 1 : index
      %c0_46 = arith.constant 0 : index
      %131 = vector.load %arg3[%c1, %c0_46] : memref<2x128xf32, #tpu.memory_space<vmem>>, vector<1x128xf32>
      %cst_47 = arith.constant dense<0.000000e+00> : vector<8xf32>
      %132 = vector.multi_reduction <add>, %129, %cst_47 [1] : vector<8x128xf32> to vector<8xf32>
      %133 = vector.shape_cast %132 : vector<8xf32> to vector<8x1xf32>
      %cst_48 = arith.constant 1.280000e+02 : f32
      %134 = vector.broadcast %cst_48 : f32 to vector<8x1xf32>
      %135 = arith.divf %133, %134 : vector<8x1xf32>
      %136 = vector.broadcast %135 : vector<8x1xf32> to vector<8x128xf32>
      %137 = arith.subf %129, %136 : vector<8x128xf32>
      %138 = arith.mulf %137, %137 : vector<8x128xf32>
      %cst_49 = arith.constant dense<0.000000e+00> : vector<8xf32>
      %139 = vector.multi_reduction <add>, %138, %cst_49 [1] : vector<8x128xf32> to vector<8xf32>
      %140 = vector.shape_cast %139 : vector<8xf32> to vector<8x1xf32>
      %cst_50 = arith.constant 1.280000e+02 : f32
      %141 = vector.broadcast %cst_50 : f32 to vector<8x1xf32>
      %142 = arith.divf %140, %141 : vector<8x1xf32>
      %143 = vector.broadcast %135 : vector<8x1xf32> to vector<8x128xf32>
      %144 = arith.subf %129, %143 : vector<8x128xf32>
      %cst_51 = arith.constant 9.99999974E-6 : f32
      %145 = vector.broadcast %cst_51 : f32 to vector<8x1xf32>
      %146 = arith.addf %142, %145 : vector<8x1xf32>
      %147 = math.rsqrt %146 : vector<8x1xf32>
      %148 = vector.broadcast %147 : vector<8x1xf32> to vector<8x128xf32>
      %149 = arith.mulf %144, %148 : vector<8x128xf32>
      %150 = vector.broadcast %130 : vector<1x128xf32> to vector<8x128xf32>
      %151 = arith.mulf %149, %150 : vector<8x128xf32>
      %152 = vector.broadcast %131 : vector<1x128xf32> to vector<8x128xf32>
      %153 = arith.addf %151, %152 : vector<8x128xf32>
      %154 = arith.truncf %153 : vector<8x128xf32> to vector<8x128xbf16>
      %c0_52 = arith.constant 0 : index
      %c0_53 = arith.constant 0 : index
      %155 = vector.load %arg10[%c0_52, %c0_53] : memref<8x128xbf16, #tpu.memory_space<vmem>>, vector<8x128xbf16>
      tpu.vector_store %arg10[%c0_52, %c0_53], %154 {strides = array<i32>} : memref<8x128xbf16, #tpu.memory_space<vmem>>, vector<8x128xbf16>,
    } else {
    }
    %c0_3 = arith.constant 0 : index
    %c0_4 = arith.constant 0 : index
    %13 = vector.load %arg10[%c0_3, %c0_4] : memref<8x128xbf16, #tpu.memory_space<vmem>>, vector<8x128xbf16>
    %c0_5 = arith.constant 0 : index
    %c0_6 = arith.constant 0 : index
    %c0_7 = arith.constant 0 : index
    %14 = vector.load %arg4[%c0_5, %c0_6, %c0_7] : memref<1x128x384xbf16, #tpu.memory_space<vmem>>, vector<1x128x384xbf16>
    %15 = vector.shape_cast %14 : vector<1x128x384xbf16> to vector<128x384xbf16>
    %cst = arith.constant dense<0.000000e+00> : vector<8x384xf32>
    %16 = tpu.matmul %13, %15, %cst {dimension_numbers = #tpu.dot_dimension_numbers<[1], [0], [0], [1], [0, 0, 1, 1], [], []>} : vector<8x128xbf16>, vector<128x384xbf16>, vector<8x384xf32> -> vector<8x384xf32>
    %17 = vector.broadcast %2 : vector<1x384xf32> to vector<8x384xf32>
    %18 = arith.addf %16, %17 : vector<8x384xf32>
    %19 = vector.shape_cast %18 : vector<8x384xf32> to vector<1x8x4x96xf32>
    %20 = tpu.transpose %19, [0, 2, 1, 3] : vector<1x8x4x96xf32> -> vector<1x4x8x96xf32>
    %21 = vector.shape_cast %20 : vector<1x4x8x96xf32> to vector<4x8x96xf32>
    %22 = vector.extract_strided_slice %21 {offsets = [0, 0, 0], sizes = [4, 8, 32], strides = [1, 1, 1]} : vector<4x8x96xf32> to vector<4x8x32xf32>
    %cst_8 = arith.constant 0.176776692 : f32
    %23 = vector.broadcast %cst_8 : f32 to vector<4x8x32xf32>
    %24 = arith.mulf %22, %23 : vector<4x8x32xf32>
    %25 = vector.extract_strided_slice %21 {offsets = [0, 0, 32], sizes = [4, 8, 32], strides = [1, 1, 1]} : vector<4x8x96xf32> to vector<4x8x32xf32>
    %26 = vector.extract_strided_slice %21 {offsets = [0, 0, 64], sizes = [4, 8, 32], strides = [1, 1, 1]} : vector<4x8x96xf32> to vector<4x8x32xf32>
    %27 = arith.truncf %24 : vector<4x8x32xf32> to vector<4x8x32xbf16>
    %28 = arith.truncf %25 : vector<4x8x32xf32> to vector<4x8x32xbf16>
    "tpu.trace_start"() <{level = 10 : i32, message = "gqd,gkd->gqk"}> : () -> ()
    %cst_9 = arith.constant dense<0.000000e+00> : vector<4x8x8xf32>
    %29 = tpu.matmul %27, %28, %cst_9 {dimension_numbers = #tpu.dot_dimension_numbers<[2], [2], [1], [1], [0, 0, 0, 1, 1, 1], [0], [0]>} : vector<4x8x32xbf16>, vector<4x8x32xbf16>, vector<4x8x8xf32> -> vector<4x8x8xf32>
    "tpu.trace_stop"() : () -> ()
    %cst_10 = arith.constant dense<0xFF800000> : vector<4x8xf32>
    %30 = vector.multi_reduction <maximumf>, %29, %cst_10 [2] : vector<4x8x8xf32> to vector<4x8xf32>
    %31 = vector.shape_cast %30 : vector<4x8xf32> to vector<4x8x1xf32>
    %32 = vector.broadcast %31 : vector<4x8x1xf32> to vector<4x8x8xf32>
    %33 = arith.subf %29, %32 : vector<4x8x8xf32>
    %34 = math.exp %33 : vector<4x8x8xf32>
    %cst_11 = arith.constant dense<0.000000e+00> : vector<4x8xf32>
    %35 = vector.multi_reduction <add>, %34, %cst_11 [2] : vector<4x8x8xf32> to vector<4x8xf32>
    %36 = vector.shape_cast %35 : vector<4x8xf32> to vector<4x8x1xf32>
    %37 = tpu.reciprocal %36 {approx = true} : vector<4x8x1xf32> -> vector<4x8x1xf32>
    %38 = vector.broadcast %37 : vector<4x8x1xf32> to vector<4x8x8xf32>
    %39 = arith.mulf %34, %38 : vector<4x8x8xf32>
    %40 = arith.truncf %39 : vector<4x8x8xf32> to vector<4x8x8xbf16>
    %41 = arith.truncf %26 : vector<4x8x32xf32> to vector<4x8x32xbf16>
    "tpu.trace_start"() <{level = 10 : i32, message = "gqk,gkd->gqd"}> : () -> ()
    %cst_12 = arith.constant dense<0.000000e+00> : vector<4x8x32xf32>
    %42 = tpu.matmul %40, %41, %cst_12 {dimension_numbers = #tpu.dot_dimension_numbers<[2], [1], [1], [2], [0, 0, 0, 1, 1, 2], [0], [0]>} : vector<4x8x8xbf16>, vector<4x8x32xbf16>, vector<4x8x32xf32> -> vector<4x8x32xf32>
    "tpu.trace_stop"() : () -> ()
    %43 = vector.shape_cast %42 : vector<4x8x32xf32> to vector<1x4x8x32xf32>
    %44 = tpu.transpose %43, [0, 2, 1, 3] : vector<1x4x8x32xf32> -> vector<1x8x4x32xf32>
    %45 = vector.shape_cast %44 : vector<1x8x4x32xf32> to vector<8x128xf32>
    %46 = arith.truncf %45 : vector<8x128xf32> to vector<8x128xbf16>
    %c0_13 = arith.constant 0 : index
    %c0_14 = arith.constant 0 : index
    %c0_15 = arith.constant 0 : index
    %47 = vector.load %arg5[%c0_13, %c0_14, %c0_15] : memref<1x128x128xbf16, #tpu.memory_space<vmem>>, vector<1x128x128xbf16>
    %48 = vector.shape_cast %47 : vector<1x128x128xbf16> to vector<128x128xbf16>
    %cst_16 = arith.constant dense<0.000000e+00> : vector<8x128xf32>
    %49 = tpu.matmul %46, %48, %cst_16 {dimension_numbers = #tpu.dot_dimension_numbers<[1], [0], [0], [1], [0, 0, 1, 1], [], []>} : vector<8x128xbf16>, vector<128x128xbf16>, vector<8x128xf32> -> vector<8x128xf32>
    %50 = vector.broadcast %3 : vector<1x128xf32> to vector<8x128xf32>
    %51 = arith.addf %49, %50 : vector<8x128xf32>
    %52 = arith.extf %13 : vector<8x128xbf16> to vector<8x128xf32>
    %53 = arith.addf %52, %51 : vector<8x128xf32>
    %cst_17 = arith.constant dense<0.000000e+00> : vector<8xf32>
    %54 = vector.multi_reduction <add>, %53, %cst_17 [1] : vector<8x128xf32> to vector<8xf32>
    %55 = vector.shape_cast %54 : vector<8xf32> to vector<8x1xf32>
    %cst_18 = arith.constant 1.280000e+02 : f32
    %56 = vector.broadcast %cst_18 : f32 to vector<8x1xf32>
    %57 = arith.divf %55, %56 : vector<8x1xf32>
    %58 = vector.broadcast %57 : vector<8x1xf32> to vector<8x128xf32>
    %59 = arith.subf %53, %58 : vector<8x128xf32>
    %60 = arith.mulf %59, %59 : vector<8x128xf32>
    %cst_19 = arith.constant dense<0.000000e+00> : vector<8xf32>
    %61 = vector.multi_reduction <add>, %60, %cst_19 [1] : vector<8x128xf32> to vector<8xf32>
    %62 = vector.shape_cast %61 : vector<8xf32> to vector<8x1xf32>
    %cst_20 = arith.constant 1.280000e+02 : f32
    %63 = vector.broadcast %cst_20 : f32 to vector<8x1xf32>
    %64 = arith.divf %62, %63 : vector<8x1xf32>
    %65 = vector.broadcast %57 : vector<8x1xf32> to vector<8x128xf32>
    %66 = arith.subf %53, %65 : vector<8x128xf32>
    %cst_21 = arith.constant 9.99999974E-6 : f32
    %67 = vector.broadcast %cst_21 : f32 to vector<8x1xf32>
    %68 = arith.addf %64, %67 : vector<8x1xf32>
    %69 = math.rsqrt %68 : vector<8x1xf32>
    %70 = vector.broadcast %69 : vector<8x1xf32> to vector<8x128xf32>
    %71 = arith.mulf %66, %70 : vector<8x128xf32>
    %72 = vector.broadcast %4 : vector<1x128xf32> to vector<8x128xf32>
    %73 = arith.mulf %71, %72 : vector<8x128xf32>
    %74 = vector.broadcast %5 : vector<1x128xf32> to vector<8x128xf32>
    %75 = arith.addf %73, %74 : vector<8x128xf32>
    %76 = arith.truncf %75 : vector<8x128xf32> to vector<8x128xbf16>
    %c0_22 = arith.constant 0 : index
    %c0_23 = arith.constant 0 : index
    %c0_24 = arith.constant 0 : index
    %77 = vector.load %arg6[%c0_22, %c0_23, %c0_24] : memref<1x128x512xbf16, #tpu.memory_space<vmem>>, vector<1x128x512xbf16>
    %78 = vector.shape_cast %77 : vector<1x128x512xbf16> to vector<128x512xbf16>
    %cst_25 = arith.constant dense<0.000000e+00> : vector<8x512xf32>
    %79 = tpu.matmul %76, %78, %cst_25 {dimension_numbers = #tpu.dot_dimension_numbers<[1], [0], [0], [1], [0, 0, 1, 1], [], []>} : vector<8x128xbf16>, vector<128x512xbf16>, vector<8x512xf32> -> vector<8x512xf32>
    %80 = vector.broadcast %6 : vector<1x512xf32> to vector<8x512xf32>
    %81 = arith.addf %79, %80 : vector<8x512xf32>
    %cst_26 = arith.constant 5.000000e-01 : f32
    %82 = vector.broadcast %cst_26 : f32 to vector<8x512xf32>
    %83 = arith.mulf %82, %81 : vector<8x512xf32>
    %cst_27 = arith.constant 4.471500e-02 : f32
    %84 = vector.broadcast %cst_27 : f32 to vector<8x512xf32>
    %85 = arith.mulf %84, %81 : vector<8x512xf32>
    %86 = arith.mulf %85, %81 : vector<8x512xf32>
    %87 = arith.mulf %86, %81 : vector<8x512xf32>
    %88 = arith.addf %81, %87 : vector<8x512xf32>
    %cst_28 = arith.constant 0.797884583 : f32
    %89 = vector.broadcast %cst_28 : f32 to vector<8x512xf32>
    %90 = arith.mulf %89, %88 : vector<8x512xf32>
    %91 = math.tanh %90 : vector<8x512xf32>
    %cst_29 = arith.constant 1.000000e+00 : f32
    %92 = vector.broadcast %cst_29 : f32 to vector<8x512xf32>
    %93 = arith.addf %92, %91 : vector<8x512xf32>
    %94 = arith.mulf %83, %93 : vector<8x512xf32>
    %95 = arith.truncf %94 : vector<8x512xf32> to vector<8x512xbf16>
    %c0_30 = arith.constant 0 : index
    %c0_31 = arith.constant 0 : index
    %c0_32 = arith.constant 0 : index
    %96 = vector.load %arg7[%c0_30, %c0_31, %c0_32] : memref<1x512x128xbf16, #tpu.memory_space<vmem>>, vector<1x512x128xbf16>
    %97 = vector.shape_cast %96 : vector<1x512x128xbf16> to vector<512x128xbf16>
    %cst_33 = arith.constant dense<0.000000e+00> : vector<8x128xf32>
    %98 = tpu.matmul %95, %97, %cst_33 {dimension_numbers = #tpu.dot_dimension_numbers<[1], [0], [0], [1], [0, 0, 1, 1], [], []>} : vector<8x512xbf16>, vector<512x128xbf16>, vector<8x128xf32> -> vector<8x128xf32>
    %99 = vector.broadcast %7 : vector<1x128xf32> to vector<8x128xf32>
    %100 = arith.addf %98, %99 : vector<8x128xf32>
    %101 = arith.addf %75, %100 : vector<8x128xf32>
    %cst_34 = arith.constant dense<0.000000e+00> : vector<8xf32>
    %102 = vector.multi_reduction <add>, %101, %cst_34 [1] : vector<8x128xf32> to vector<8xf32>
    %103 = vector.shape_cast %102 : vector<8xf32> to vector<8x1xf32>
    %cst_35 = arith.constant 1.280000e+02 : f32
    %104 = vector.broadcast %cst_35 : f32 to vector<8x1xf32>
    %105 = arith.divf %103, %104 : vector<8x1xf32>
    %106 = vector.broadcast %105 : vector<8x1xf32> to vector<8x128xf32>
    %107 = arith.subf %101, %106 : vector<8x128xf32>
    %108 = arith.mulf %107, %107 : vector<8x128xf32>
    %cst_36 = arith.constant dense<0.000000e+00> : vector<8xf32>
    %109 = vector.multi_reduction <add>, %108, %cst_36 [1] : vector<8x128xf32> to vector<8xf32>
    %110 = vector.shape_cast %109 : vector<8xf32> to vector<8x1xf32>
    %cst_37 = arith.constant 1.280000e+02 : f32
    %111 = vector.broadcast %cst_37 : f32 to vector<8x1xf32>
    %112 = arith.divf %110, %111 : vector<8x1xf32>
    %113 = vector.broadcast %105 : vector<8x1xf32> to vector<8x128xf32>
    %114 = arith.subf %101, %113 : vector<8x128xf32>
    %cst_38 = arith.constant 9.99999974E-6 : f32
    %115 = vector.broadcast %cst_38 : f32 to vector<8x1xf32>
    %116 = arith.addf %112, %115 : vector<8x1xf32>
    %117 = math.rsqrt %116 : vector<8x1xf32>
    %118 = vector.broadcast %117 : vector<8x1xf32> to vector<8x128xf32>
    %119 = arith.mulf %114, %118 : vector<8x128xf32>
    %120 = vector.broadcast %8 : vector<1x128xf32> to vector<8x128xf32>
    %121 = arith.mulf %119, %120 : vector<8x128xf32>
    %122 = vector.broadcast %9 : vector<1x128xf32> to vector<8x128xf32>
    %123 = arith.addf %121, %122 : vector<8x128xf32>
    %124 = arith.truncf %123 : vector<8x128xf32> to vector<8x128xbf16>
    %c0_39 = arith.constant 0 : index
    %c0_40 = arith.constant 0 : index
    %125 = vector.load %arg10[%c0_39, %c0_40] : memref<8x128xbf16, #tpu.memory_space<vmem>>, vector<8x128xbf16>
    tpu.vector_store %arg10[%c0_39, %c0_40], %124 {strides = array<i32>} : memref<8x128xbf16, #tpu.memory_space<vmem>>, vector<8x128xbf16>,
    %c1_i32 = arith.constant 1 : i32
    %126 = arith.cmpi eq, %arg1, %c1_i32 : i32
    %127 = arith.extui %126 : i1 to i32
    %c0_i32_41 = arith.constant 0 : i32
    %128 = arith.cmpi ne, %127, %c0_i32_41 : i32
    scf.if %128 {
      %c0_42 = arith.constant 0 : index
      %c0_43 = arith.constant 0 : index
      %129 = vector.load %arg9[%c0_42, %c0_43] : memref<8x128xf32, #tpu.memory_space<vmem>>, vector<8x128xf32>
      tpu.vector_store %arg9[%c0_42, %c0_43], %123 {strides = array<i32>} : memref<8x128xf32, #tpu.memory_space<vmem>>, vector<8x128xf32>,
    } else {
    }
    return
  }
  func.func @transform_0(%arg0: i32, %arg1: i32) -> (i32, i32) {
    %c0_i32 = arith.constant 0 : i32
    %c0_i32_0 = arith.constant 0 : i32
    return %arg0, %c0_i32 : i32, i32
  }
  func.func @transform_1(%arg0: i32, %arg1: i32) -> (i32, i32) {
    %c0_i32 = arith.constant 0 : i32
    %c0_i32_0 = arith.constant 0 : i32
    %c0_i32_1 = arith.constant 0 : i32
    return %c0_i32, %c0_i32_0 : i32, i32
  }
  func.func @transform_2(%arg0: i32, %arg1: i32) -> (i32, i32, i32) {
    %c0_i32 = arith.constant 0 : i32
    %c0_i32_0 = arith.constant 0 : i32
    %c0_i32_1 = arith.constant 0 : i32
    return %arg1, %c0_i32, %c0_i32_0 : i32, i32, i32
  }
  func.func @transform_3(%arg0: i32, %arg1: i32) -> (i32, i32, i32) {
    %c0_i32 = arith.constant 0 : i32
    %c0_i32_0 = arith.constant 0 : i32
    %c0_i32_1 = arith.constant 0 : i32
    return %arg1, %c0_i32, %c0_i32_0 : i32, i32, i32
  }
  func.func @transform_4(%arg0: i32, %arg1: i32) -> (i32, i32, i32) {
    %c0_i32 = arith.constant 0 : i32
    %c0_i32_0 = arith.constant 0 : i32
    %c0_i32_1 = arith.constant 0 : i32
    return %arg1, %c0_i32, %c0_i32_0 : i32, i32, i32
  }
  func.func @transform_5(%arg0: i32, %arg1: i32) -> (i32, i32, i32) {
    %c0_i32 = arith.constant 0 : i32
    %c0_i32_0 = arith.constant 0 : i32
    %c0_i32_1 = arith.constant 0 : i32
    return %arg1, %c0_i32, %c0_i32_0 : i32, i32, i32
  }
  func.func @transform_6(%arg0: i32, %arg1: i32) -> (i32, i32, i32) {
    %c0_i32 = arith.constant 0 : i32
    %c0_i32_0 = arith.constant 0 : i32
    %c0_i32_1 = arith.constant 0 : i32
    return %arg1, %c0_i32, %c0_i32_0 : i32, i32, i32
  }
  func.func @transform_7(%arg0: i32, %arg1: i32) -> (i32, i32) {
    %c0_i32 = arith.constant 0 : i32
    %c0_i32_0 = arith.constant 0 : i32
    return %arg0, %c0_i32 : i32, i32
  }
}

module attributes {stable_mosaic.version = 11 : i64} {
  func.func @rd_pooler_kernel(%arg0: i32, %arg1: memref<2x128xf32, #tpu.memory_space<vmem>>, %arg2: memref<128x128xbf16, #tpu.memory_space<vmem>>, %arg3: memref<1x128xf32, #tpu.memory_space<vmem>>, %arg4: memref<2x128xf32, #tpu.memory_space<vmem>>, %arg5: memref<2x128xf32, #tpu.memory_space<vmem>>) attributes {dimension_semantics = [#tpu.dimension_semantics<arbitrary>], iteration_bounds = array<i64: 1>, scalar_prefetch = 0 : i64, scratch_operands = 0 : i64, tpu.core_type = #tpu.core_type<tc>, window_params = [{pipeline_mode = #tpu.pipeline_mode<synchronous>, transform_indices = @transform_0, window_bounds = array<i64: 2, 128>}, {pipeline_mode = #tpu.pipeline_mode<synchronous>, transform_indices = @transform_1, window_bounds = array<i64: 128, 128>}, {pipeline_mode = #tpu.pipeline_mode<synchronous>, transform_indices = @transform_2, window_bounds = array<i64: 1, 128>}, {pipeline_mode = #tpu.pipeline_mode<synchronous>, transform_indices = @transform_3, window_bounds = array<i64: 2, 128>}, {pipeline_mode = #tpu.pipeline_mode<synchronous>, transform_indices = @transform_4, window_bounds = array<i64: 2, 128>}]} {
    %c0 = arith.constant 0 : index
    %c0_0 = arith.constant 0 : index
    %0 = vector.load %arg1[%c0, %c0_0] : memref<2x128xf32, #tpu.memory_space<vmem>>, vector<2x128xf32>
    %1 = arith.truncf %0 : vector<2x128xf32> to vector<2x128xbf16>
    %c0_1 = arith.constant 0 : index
    %c0_2 = arith.constant 0 : index
    %2 = vector.load %arg2[%c0_1, %c0_2] : memref<128x128xbf16, #tpu.memory_space<vmem>>, vector<128x128xbf16>
    %cst = arith.constant dense<0.000000e+00> : vector<2x128xf32>
    %3 = tpu.matmul %1, %2, %cst {dimension_numbers = #tpu.dot_dimension_numbers<[1], [0], [0], [1], [0, 0, 1, 1], [], []>} : vector<2x128xbf16>, vector<128x128xbf16>, vector<2x128xf32> -> vector<2x128xf32>
    %c0_3 = arith.constant 0 : index
    %c0_4 = arith.constant 0 : index
    %4 = vector.load %arg3[%c0_3, %c0_4] : memref<1x128xf32, #tpu.memory_space<vmem>>, vector<1x128xf32>
    %5 = vector.broadcast %4 : vector<1x128xf32> to vector<2x128xf32>
    %6 = arith.addf %3, %5 : vector<2x128xf32>
    %7 = math.tanh %6 : vector<2x128xf32>
    %c0_5 = arith.constant 0 : index
    %c0_6 = arith.constant 0 : index
    %8 = vector.load %arg4[%c0_5, %c0_6] : memref<2x128xf32, #tpu.memory_space<vmem>>, vector<2x128xf32>
    %9 = arith.mulf %7, %8 : vector<2x128xf32>
    %c0_7 = arith.constant 0 : index
    %c0_8 = arith.constant 0 : index
    %10 = vector.load %arg5[%c0_7, %c0_8] : memref<2x128xf32, #tpu.memory_space<vmem>>, vector<2x128xf32>
    tpu.vector_store %arg5[%c0_7, %c0_8], %9 {strides = array<i32>} : memref<2x128xf32, #tpu.memory_space<vmem>>, vector<2x128xf32>,
    return
  }
  func.func @transform_0(%arg0: i32) -> (i32, i32) {
    %c0_i32 = arith.constant 0 : i32
    %c0_i32_0 = arith.constant 0 : i32
    %c0_i32_1 = arith.constant 0 : i32
    return %c0_i32, %c0_i32_0 : i32, i32
  }
  func.func @transform_1(%arg0: i32) -> (i32, i32) {
    %c0_i32 = arith.constant 0 : i32
    %c0_i32_0 = arith.constant 0 : i32
    %c0_i32_1 = arith.constant 0 : i32
    return %c0_i32, %c0_i32_0 : i32, i32
  }
  func.func @transform_2(%arg0: i32) -> (i32, i32) {
    %c0_i32 = arith.constant 0 : i32
    %c0_i32_0 = arith.constant 0 : i32
    %c0_i32_1 = arith.constant 0 : i32
    return %c0_i32, %c0_i32_0 : i32, i32
  }
  func.func @transform_3(%arg0: i32) -> (i32, i32) {
    %c0_i32 = arith.constant 0 : i32
    %c0_i32_0 = arith.constant 0 : i32
    %c0_i32_1 = arith.constant 0 : i32
    return %c0_i32, %c0_i32_0 : i32, i32
  }
  func.func @transform_4(%arg0: i32) -> (i32, i32) {
    %c0_i32 = arith.constant 0 : i32
    %c0_i32_0 = arith.constant 0 : i32
    %c0_i32_1 = arith.constant 0 : i32
    return %c0_i32, %c0_i32_0 : i32, i32
  }
}

</mosaic_0001>

<llo_original>
// kernel: rd_model_forward.3
$region0: #{rd_model_forward.3}
  #allocation0 [shape = 'u32[]', space=smem, size = 0x4, offset = 0x4, fixed_abs, tag = 'smem constant byte address 0x4 - core index']
  #allocation1 [shape = 'u32[144,128]{1,0:T(1,128)}', space=vmem, size = 0x12000, scoped, tag = 'internal scratch']
  %s0 = inlined_call_operand.vmem [shape: f32[2,128], index: 0, kind: input, shape index: {}]
  %s1 = inlined_call_operand.vmem [shape: bf16[128,128], index: 1, kind: input, shape index: {}]
  %s2 = inlined_call_operand.vmem [shape: f32[1,128], index: 2, kind: input, shape index: {}]
  %s3 = inlined_call_operand.vmem [shape: f32[2,128], index: 3, kind: input, shape index: {}]
  %s4 = inlined_call_operand.hbm [shape: f32[2,128], index: 4, kind: output, shape index: {}]
  %s5 = sld [smem:[#allocation0]]
  $region26: #{rd_model_forward.3} parent=0
    _
  %s7 = ssub.s32 1, %s5
  %s8 = scalar_select 0, %s7, %s5
  $region1: #{rd_model_forward.3} parent=0
    #allocation2 [shape = 'u8[1024]{0}', space=vmem, size = 0x400, scoped, tag = 'output window, operand 0, single buffered']
    #allocation3 [shape = 's32[1]{0}', space=sflag, size = 0x4, scoped, tag = 'scoped memory for rd_model_forward.3']
    %9 = vsyncpa [#allocation3], 0
    // Predicated region
    $region2: #{rd_model_forward.3} parent=1 // pred_check
      _
    $region3: #{rd_model_forward.3} parent=1 // pred_check_branch
      %11 = sbr.rel (0) target = $region5
    $region4: #{rd_model_forward.3} parent=1 // pred_region
      _
    $region5: #{rd_model_forward.3} parent=1 // pred_fallthru
      _
    // Predicated region
    $region6: #{rd_model_forward.3} parent=1 // pred_check
      _
    $region7: #{rd_model_forward.3} parent=1 // pred_check_branch
      %13 = sbr.rel (0) target = $region9
    $region8: #{rd_model_forward.3} parent=1 // pred_region
      _
    $region9: #{rd_model_forward.3} parent=1 // pred_fallthru
      _
    // Predicated region
    $region10: #{rd_model_forward.3} parent=1 // pred_check
      _
    $region11: #{rd_model_forward.3} parent=1 // pred_check_branch
      %15 = sbr.rel (0) target = $region13
    $region12: #{rd_model_forward.3} parent=1 // pred_region
      _
    $region13: #{rd_model_forward.3} parent=1 // pred_fallthru
      _
    // Predicated region
    $region14: #{rd_model_forward.3} parent=1 // pred_check
      _
    $region15: #{rd_model_forward.3} parent=1 // pred_check_branch
      %17 = sbr.rel (0) target = $region17
    $region16: #{rd_model_forward.3} parent=1 // pred_region
      _
    $region17: #{rd_model_forward.3} parent=1 // pred_fallthru
      _
    %v19 = vld [vmem:[%s0] sm:$0x3]
    %v20 = vpack.c.bf16 %v19, %v19
    %v21 = vld [vmem:[%s1] sm:$0xf]
    %v22 = vld [vmem:[%s1 + $0x4] sm:$0xf]
    %v23 = vld [vmem:[%s1 + $0x8] sm:$0xf]
    %v24 = vld [vmem:[%s1 + $0xc] sm:$0xf]
    %v25 = vld [vmem:[%s1 + $0x10] sm:$0xf]
    %v26 = vld [vmem:[%s1 + $0x14] sm:$0xf]
    %v27 = vld [vmem:[%s1 + $0x18] sm:$0xf]
    %v28 = vld [vmem:[%s1 + $0x1c] sm:$0xf]
    %v29 = vld [vmem:[%s1 + $0x20] sm:$0xf]
    %v30 = vld [vmem:[%s1 + $0x24] sm:$0xf]
    %v31 = vld [vmem:[%s1 + $0x28] sm:$0xf]
    %v32 = vld [vmem:[%s1 + $0x2c] sm:$0xf]
    %v33 = vld [vmem:[%s1 + $0x30] sm:$0xf]
    %v34 = vld [vmem:[%s1 + $0x34] sm:$0xf]
    %v35 = vld [vmem:[%s1 + $0x38] sm:$0xf]
    %v36 = vld [vmem:[%s1 + $0x3c] sm:$0xf]
    %v37 = vld [vmem:[%s2] sm:$0x1]
    %v39 = vlaneseq
    %v40 = vshrl.u32 %v39, 7
    %v41 = vsub.s32 0, %v40
    %v42 = vrot.slane %v37, %v41
    %v60 = vunpack.c.l.b16 %v21
    %v61 = vunpack.c.l.b16 %v22
    %v62 = vunpack.c.l.b16 %v23
    %v63 = vunpack.c.l.b16 %v24
    %v64 = vunpack.c.l.b16 %v25
    %v65 = vunpack.c.l.b16 %v26
    %v66 = vunpack.c.l.b16 %v27
    %v67 = vunpack.c.l.b16 %v28
    %v68 = vunpack.c.l.b16 %v29
    %v69 = vunpack.c.l.b16 %v30
    %v70 = vunpack.c.l.b16 %v31
    %v71 = vunpack.c.l.b16 %v32
    %v72 = vunpack.c.l.b16 %v33
    %v73 = vunpack.c.l.b16 %v34
    %v74 = vunpack.c.l.b16 %v35
    %v75 = vunpack.c.l.b16 %v36
    %v76 = vpack.c.b16 %v61, %v60
    %v77 = vpack.c.b16 %v63, %v62
    %v78 = vpack.c.b16 %v65, %v64
    %v79 = vpack.c.b16 %v67, %v66
    %v80 = vpack.c.b16 %v69, %v68
    %v81 = vpack.c.b16 %v71, %v70
    %v82 = vpack.c.b16 %v73, %v72
    %v83 = vpack.c.b16 %v75, %v74
    %92 = vmatprep.subr.bf16.mxu0 0
    %93 = vmatpush1.bf16.msra.mxu0 %v83
    %94 = vmatprep.subr.bf16.mxu0 0
    %95 = vmatpush1.bf16.msra.mxu0 %v82
    %96 = vmatprep.subr.bf16.mxu0 0
    %97 = vmatpush1.bf16.msra.mxu0 %v81
    %98 = vmatprep.subr.bf16.mxu0 0
    %99 = vmatpush1.bf16.msra.mxu0 %v80
    %100 = vmatprep.subr.bf16.mxu0 0
    %101 = vmatpush1.bf16.msra.mxu0 %v79
    %102 = vmatprep.subr.bf16.mxu0 0
    %103 = vmatpush1.bf16.msra.mxu0 %v78
    %104 = vmatprep.subr.bf16.mxu0 0
    %105 = vmatpush1.bf16.msra.mxu0 %v77
    %106 = vmatprep.subr.bf16.mxu0 0
    %107 = vmatpush1.bf16.msra.mxu0 %v76
    %108 = vmatprep.subr.bf16.mxu0 0
    %109 = vmatpush2.bf16.msra.mxu0 0
    %110 = vmatprep.subr.bf16.mxu0 0
    %111 = vmatpush2.bf16.msra.mxu0 0
    %112 = vmatprep.subr.bf16.mxu0 0
    %113 = vmatpush2.bf16.msra.mxu0 0
    %114 = vmatprep.subr.bf16.mxu0 0
    %115 = vmatpush2.bf16.msra.mxu0 0
    %116 = vmatprep.subr.bf16.mxu0 0
    %117 = vmatpush2.bf16.msra.mxu0 0
    %118 = vmatprep.subr.bf16.mxu0 0
    %119 = vmatpush2.bf16.msra.mxu0 0
    %120 = vmatprep.subr.bf16.mxu0 0
    %121 = vmatpush2.bf16.msra.mxu0 0
    %122 = vmatprep.subr.bf16.mxu0 0
    %123 = vmatpush2.bf16.msra.mxu0 0
    %124 = vmatprep.mubr.bf16.mxu0 0
    %125 = vmatmul.mubr.bf16.gmra.mxu0 %v20
    %v126 = vpop.f32.mrf.mxu0
    %v127 = vadd.f32 %v42, %v126
    %v128 = vpop.f32.mrf.mxu0
    %v129 = vpop.f32.mrf.mxu0
    %v130 = vpop.f32.mrf.mxu0
    %131 = vdwg.mxu0
    %v132 = vtanh.pop %v127
    %v133 = vld [vmem:[%s3] sm:$0x3]
    %v134 = vmul.f32 %v132, %v133
    %135 = vst [vmem:[#allocation2] sm:$0x3] %v134
    // Predicated region
    $region18: #{rd_model_forward.3} parent=1 // pred_check
      _
    $region19: #{rd_model_forward.3} parent=1 // pred_check_branch
      %137 = sbr.rel (0) target = $region21
    $region20: #{rd_model_forward.3} parent=1 // pred_region
      %s139 = ssub.s32 32, 32
      %140 = vsyncadd [#allocation3], %s139
      %s142 = sshll.u32 [#allocation2], 4
      %s143 = int_to_ptr.vmem [resolvable:$true] %s142
      %145 = dma.vmem_to_hbm [thread:$0]  %s143, 32, %s4, [#allocation3]
    $region21: #{rd_model_forward.3} parent=1 // pred_fallthru
      _
    // Predicated region
    $region22: #{rd_model_forward.3} parent=1 // pred_check
      _
    $region23: #{rd_model_forward.3} parent=1 // pred_check_branch
      %147 = sbr.rel (0) target = $region25
    $region24: #{rd_model_forward.3} parent=1 // pred_region
      %148 = dma.done [#allocation3], 32
    $region25: #{rd_model_forward.3} parent=1 // pred_fallthru
      _
    %149 = vsyncpa [#allocation3], 1

// kernel: rd_model_forward.2
$region0: #{rd_model_forward.2}
  #allocation0 [shape = 'u32[]', space=smem, size = 0x4, offset = 0x4, fixed_abs, tag = 'smem constant byte address 0x4 - core index']
  #allocation1 [shape = 'u32[144,128]{1,0:T(1,128)}', space=vmem, size = 0x12000, scoped, tag = 'internal scratch']
  #allocation2 [shape = 'bf16[8,128]{1,0:T(8,128)(2,1)}', space=vmem, size = 0x800, scoped, tag = 'scratch operand']
  %s0 = inlined_call_operand.vmem [shape: f32[16,128], index: 0, kind: input, shape index: {}]
  %s1 = inlined_call_operand.vmem [shape: f32[2,128], index: 1, kind: input, shape index: {}]
  %s2 = inlined_call_operand.hbm [shape: bf16[2,128,384], index: 2, kind: input, shape index: {}]
  %s3 = inlined_call_operand.vmem [shape: bf16[2,128,128], index: 3, kind: input, shape index: {}]
  %s4 = inlined_call_operand.hbm [shape: bf16[2,128,512], index: 4, kind: input, shape index: {}]
  %s5 = inlined_call_operand.hbm [shape: bf16[2,512,128], index: 5, kind: input, shape index: {}]
  %s6 = inlined_call_operand.vmem [shape: f32[2,8,512], index: 6, kind: input, shape index: {}]
  %s7 = inlined_call_operand.vmem [shape: f32[16,128], index: 7, kind: output, shape index: {}]
  %s8 = sld [smem:[#allocation0]]
  $region81: #{rd_model_forward.2} parent=0
    _
  %s10 = ssub.s32 1, %s8
  %s11 = scalar_select 0, %s10, %s8
  $region1: #{rd_model_forward.2} parent=0
    #allocation3 [shape = 'u8[196608]{0}', space=vmem, size = 0x30000, scoped, tag = 'input window, operand 2']
    #allocation4 [shape = 's32[2]{0}', space=sflag, size = 0x8, scoped, tag = 'scoped memory for rd_model_forward.2']
    #allocation5 [shape = 'u8[262144]{0}', space=vmem, size = 0x40000, scoped, tag = 'input window, operand 4']
    #allocation6 [shape = 's32[2]{0}', space=sflag, size = 0x8, scoped, tag = 'scoped memory for rd_model_forward.2']
    #allocation7 [shape = 'u8[262144]{0}', space=vmem, size = 0x40000, scoped, tag = 'input window, operand 5']
    %12 = vsyncpa [#allocation4], 0
    %s13 = scalar_lea.sflag [#allocation4], 1
    %14 = vsyncpa %s13, 0
    %15 = vsyncpa [#allocation6], 0
    %s16 = scalar_lea.sflag [#allocation6], 1
    %17 = vsyncpa %s16, 0
    loop: start=0, step=1, limit=6
    $region2: #{rd_model_forward.2} parent=1 // loop_pre_header
      _
    $region3: #{rd_model_forward.2} parent=1 // loop_header
      %s19 = sphi 0, %s23
      %p20 = scmp.ge.s32.totalorder %s19, 6
      %s26 = sphi 0, %s38
      %s27 = sphi 0, %s34
      %s28 = sphi 0, %s26
      %s29 = sphi 0, %s27
      %s30 = sphi 0, %s28
      %s31 = sphi 0, %s29
      %s41 = sphi 0, %s43
      %s44 = sphi 0, %s41
      %s45 = sphi 0, %s44
      %s61 = sphi 0, %s45
      %s65 = sphi 0, %s65
      %s67 = sphi 0, %s65
      %s68 = sphi 0, %s67
      %s82 = sphi 0, %s68
      %s88 = sphi 0, %s90
      %s91 = sphi 0, %s88
      %s92 = sphi 0, %s91
      %s108 = sphi 0, %s92
      %s114 = sphi 0, %s116
      %s117 = sphi 0, %s114
      %s118 = sphi 0, %s117
      %s134 = sphi 0, %s118
      %s140 = sphi 0, %s142
      %s143 = sphi 0, %s140
      %s144 = sphi 0, %s143
      %s160 = sphi 0, %s144
      %s166 = sphi 0, %s168
      %s169 = sphi 0, %s166
      %s170 = sphi 0, %s169
      %s186 = sphi 0, %s170
      %s192 = sphi 0, %s194
      %s195 = sphi 0, %s192
      %s196 = sphi 0, %s195
      %s212 = sphi 0, %s196
      %s218 = sphi 0, %s220
      %s221 = sphi 0, %s218
      %s222 = sphi 0, %s221
      %s238 = sphi 0, %s222
    $region4: #{rd_model_forward.2} parent=1 // loop_header_branch
      %22 = sbr.rel (%p20) target = $region8
    $region5: #{rd_model_forward.2} parent=1 // loop_body
      %s24 = ssub.s32 %s19, 1
      %s25 = ssub.s32 %s19, 2
      %s32 = sadd.s32 1, %s27
      %p33 = scmp.ge.s32.totalorder %s32, 2
      %s34 = scalar_select %p33, 0, %s32
      %s35 = sadd.s32 1, %s26
      %s36 = scalar_select %p33, %s35, %s26
      %p37 = scmp.ge.s32.totalorder %s36, 2
      %s38 = scalar_select %p37, 0, %s36
      %s39 = ssub.s32 %s26, %s38
      %p40 = scmp.eq.s32.totalorder %s39, 0
      %s42 = sadd.s32 %s41, 1
      %s43 = scalar_select %p40, %s41, %s42
      %p46 = pneg %p40
      %p47 = scmp.eq.s32.totalorder %s19, 3
      %p48 = por %p46, %p47
      %p49 = scmp.ne.s32.totalorder %s41, %s44
      %p50 = scmp.eq.s32.totalorder %s19, 0
      %p51 = por %p49, %p50
      %p52 = scmp.ne.s32.totalorder %s41, %s44
      %p53 = scmp.eq.s32.totalorder %s24, 3
      %p54 = por %p52, %p53
      %p55 = scmp.ne.s32.totalorder %s44, %s45
      %p56 = scmp.eq.s32.totalorder %s24, 0
      %p57 = por %p55, %p56
      %p58 = scmp.ne.s32.totalorder %s44, %s45
      %p59 = scmp.eq.s32.totalorder %s25, 3
      %p60 = por %p58, %p59
      %p62 = scmp.ne.s32.totalorder %s45, %s61
      %p63 = scmp.eq.s32.totalorder %s25, 0
      %p64 = por %p62, %p63
      %s66 = sadd.s32 %s65, 1
      %p69 = scmp.eq.s32.totalorder %s19, 3
      %p70 = scmp.ne.s32.totalorder %s65, %s67
      %p71 = scmp.eq.s32.totalorder %s19, 0
      %p72 = por %p70, %p71
      %p73 = scmp.ne.s32.totalorder %s65, %s67
      %p74 = scmp.eq.s32.totalorder %s24, 3
      %p75 = por %p73, %p74
      %p76 = scmp.ne.s32.totalorder %s67, %s68
      %p77 = scmp.eq.s32.totalorder %s24, 0
      %p78 = por %p76, %p77
      %p79 = scmp.ne.s32.totalorder %s67, %s68
      %p80 = scmp.eq.s32.totalorder %s25, 3
      %p81 = por %p79, %p80
      %p83 = scmp.ne.s32.totalorder %s68, %s82
      %p84 = scmp.eq.s32.totalorder %s25, 0
      %p85 = por %p83, %p84
      %s86 = ssub.s32 %s27, %s34
      %p87 = scmp.eq.s32.totalorder %s86, 0
      %s89 = sadd.s32 %s88, 1
      %s90 = scalar_select %p87, %s88, %s89
      %p93 = pneg %p87
      %p94 = scmp.eq.s32.totalorder %s19, 3
      %p95 = por %p93, %p94
      %p96 = scmp.ne.s32.totalorder %s88, %s91
      %p97 = scmp.eq.s32.totalorder %s19, 0
      %p98 = por %p96, %p97
      %p99 = scmp.ne.s32.totalorder %s88, %s91
      %p100 = scmp.eq.s32.totalorder %s24, 3
      %p101 = por %p99, %p100
      %p102 = scmp.ne.s32.totalorder %s91, %s92
      %p103 = scmp.eq.s32.totalorder %s24, 0
      %p104 = por %p102, %p103
      %p105 = scmp.ne.s32.totalorder %s91, %s92
      %p106 = scmp.eq.s32.totalorder %s25, 3
      %p107 = por %p105, %p106
      %p109 = scmp.ne.s32.totalorder %s92, %s108
      %p110 = scmp.eq.s32.totalorder %s25, 0
      %p111 = por %p109, %p110
      %s112 = ssub.s32 %s27, %s34
      %p113 = scmp.eq.s32.totalorder %s112, 0
      %s115 = sadd.s32 %s114, 1
      %s116 = scalar_select %p113, %s114, %s115
      %p119 = pneg %p113
      %p120 = scmp.eq.s32.totalorder %s19, 3
      %p121 = por %p119, %p120
      %p122 = scmp.ne.s32.totalorder %s114, %s117
      %p123 = scmp.eq.s32.totalorder %s19, 0
      %p124 = por %p122, %p123
      %p125 = scmp.ne.s32.totalorder %s114, %s117
      %p126 = scmp.eq.s32.totalorder %s24, 3
      %p127 = por %p125, %p126
      %p128 = scmp.ne.s32.totalorder %s117, %s118
      %p129 = scmp.eq.s32.totalorder %s24, 0
      %p130 = por %p128, %p129
      %p131 = scmp.ne.s32.totalorder %s117, %s118
      %p132 = scmp.eq.s32.totalorder %s25, 3
      %p133 = por %p131, %p132
      %p135 = scmp.ne.s32.totalorder %s118, %s134
      %p136 = scmp.eq.s32.totalorder %s25, 0
      %p137 = por %p135, %p136
      %s138 = ssub.s32 %s27, %s34
      %p139 = scmp.eq.s32.totalorder %s138, 0
      %s141 = sadd.s32 %s140, 1
      %s142 = scalar_select %p139, %s140, %s141
      %p145 = pneg %p139
      %p146 = scmp.eq.s32.totalorder %s19, 3
      %p147 = por %p145, %p146
      %p148 = scmp.ne.s32.totalorder %s140, %s143
      %p149 = scmp.eq.s32.totalorder %s19, 0
      %p150 = por %p148, %p149
      %p151 = scmp.ne.s32.totalorder %s140, %s143
      %p152 = scmp.eq.s32.totalorder %s24, 3
      %p153 = por %p151, %p152
      %p154 = scmp.ne.s32.totalorder %s143, %s144
      %p155 = scmp.eq.s32.totalorder %s24, 0
      %p156 = por %p154, %p155
      %p157 = scmp.ne.s32.totalorder %s143, %s144
      %p158 = scmp.eq.s32.totalorder %s25, 3
      %p159 = por %p157, %p158
      %p161 = scmp.ne.s32.totalorder %s144, %s160
      %p162 = scmp.eq.s32.totalorder %s25, 0
      %p163 = por %p161, %p162
      %s164 = ssub.s32 %s27, %s34
      %p165 = scmp.eq.s32.totalorder %s164, 0
      %s167 = sadd.s32 %s166, 1
      %s168 = scalar_select %p165, %s166, %s167
      %p171 = pneg %p165
      %p172 = scmp.eq.s32.totalorder %s19, 3
      %p173 = por %p171, %p172
      %p174 = scmp.ne.s32.totalorder %s166, %s169
      %p175 = scmp.eq.s32.totalorder %s19, 0
      %p176 = por %p174, %p175
      %p177 = scmp.ne.s32.totalorder %s166, %s169
      %p178 = scmp.eq.s32.totalorder %s24, 3
      %p179 = por %p177, %p178
      %p180 = scmp.ne.s32.totalorder %s169, %s170
      %p181 = scmp.eq.s32.totalorder %s24, 0
      %p182 = por %p180, %p181
      %p183 = scmp.ne.s32.totalorder %s169, %s170
      %p184 = scmp.eq.s32.totalorder %s25, 3
      %p185 = por %p183, %p184
      %p187 = scmp.ne.s32.totalorder %s170, %s186
      %p188 = scmp.eq.s32.totalorder %s25, 0
      %p189 = por %p187, %p188
      %s190 = ssub.s32 %s27, %s34
      %p191 = scmp.eq.s32.totalorder %s190, 0
      %s193 = sadd.s32 %s192, 1
      %s194 = scalar_select %p191, %s192, %s193
      %p197 = pneg %p191
      %p198 = scmp.eq.s32.totalorder %s19, 3
      %p199 = por %p197, %p198
      %p200 = scmp.ne.s32.totalorder %s192, %s195
      %p201 = scmp.eq.s32.totalorder %s19, 0
      %p202 = por %p200, %p201
      %p203 = scmp.ne.s32.totalorder %s192, %s195
      %p204 = scmp.eq.s32.totalorder %s24, 3
      %p205 = por %p203, %p204
      %p206 = scmp.ne.s32.totalorder %s195, %s196
      %p207 = scmp.eq.s32.totalorder %s24, 0
      %p208 = por %p206, %p207
      %p209 = scmp.ne.s32.totalorder %s195, %s196
      %p210 = scmp.eq.s32.totalorder %s25, 3
      %p211 = por %p209, %p210
      %p213 = scmp.ne.s32.totalorder %s196, %s212
      %p214 = scmp.eq.s32.totalorder %s25, 0
      %p215 = por %p213, %p214
      %s216 = ssub.s32 %s26, %s38
      %p217 = scmp.eq.s32.totalorder %s216, 0
      %s219 = sadd.s32 %s218, 1
      %s220 = scalar_select %p217, %s218, %s219
      %p223 = pneg %p217
      %p224 = scmp.eq.s32.totalorder %s19, 3
      %p225 = por %p223, %p224
      %p226 = scmp.ne.s32.totalorder %s218, %s221
      %p227 = scmp.eq.s32.totalorder %s19, 0
      %p228 = por %p226, %p227
      %p229 = scmp.ne.s32.totalorder %s218, %s221
      %p230 = scmp.eq.s32.totalorder %s24, 3
      %p231 = por %p229, %p230
      %p232 = scmp.ne.s32.totalorder %s221, %s222
      %p233 = scmp.eq.s32.totalorder %s24, 0
      %p234 = por %p232, %p233
      %p235 = scmp.ne.s32.totalorder %s221, %s222
      %p236 = scmp.eq.s32.totalorder %s25, 3
      %p237 = por %p235, %p236
      %p239 = scmp.ne.s32.totalorder %s222, %s238
      %p240 = scmp.eq.s32.totalorder %s25, 0
      %p241 = por %p239, %p240
      %p242 = scmp.le.s32.totalorder 1, %s19
      %p243 = scmp.lt.s32.totalorder %s19, 5
      %p244 = pnand %p242, %p243
      %p245 = pneg %p244
      // Predicated region
      $region9: #{rd_model_forward.2} parent=5 // pred_check
        _
      $region10: #{rd_model_forward.2} parent=5 // pred_check_branch
        %247 = sbr.rel (%p244) target = $region12
      $region11: #{rd_model_forward.2} parent=5 // pred_region
        %s248 = ssub.s32 %s19, 1
        // Predicated region
        $region13: #{rd_model_forward.2} parent=11 // pred_check
          %p249 = pneg %p78
        $region14: #{rd_model_forward.2} parent=11 // pred_check_branch
          %251 = sbr.rel (%p249) target = $region16
        $region15: #{rd_model_forward.2} parent=11 // pred_region
          _
        $region16: #{rd_model_forward.2} parent=11 // pred_fallthru
          _
      $region12: #{rd_model_forward.2} parent=5 // pred_fallthru
        _
      %p252 = scmp.lt.s32.totalorder %s19, 4
      // Predicated region
      $region17: #{rd_model_forward.2} parent=5 // pred_check
        %p253 = pneg %p252
      $region18: #{rd_model_forward.2} parent=5 // pred_check_branch
        %255 = sbr.rel (%p253) target = $region20
      $region19: #{rd_model_forward.2} parent=5 // pred_region
        // Predicated region
        $region21: #{rd_model_forward.2} parent=19 // pred_check
          %p256 = pneg %p51
        $region22: #{rd_model_forward.2} parent=19 // pred_check_branch
          %258 = sbr.rel (%p256) target = $region24
        $region23: #{rd_model_forward.2} parent=19 // pred_region
          %p259 = scmp.lt.s32.totalorder %s26, 1
          %s260 = scalar_select %p259, %s26, 1
          %s261 = smul.addr %s260, 8
          %s262 = scalar_lea.vmem %s0, %s261
        $region24: #{rd_model_forward.2} parent=19 // pred_fallthru
          _
        // Predicated region
        $region25: #{rd_model_forward.2} parent=19 // pred_check
          %p263 = pneg %p98
        $region26: #{rd_model_forward.2} parent=19 // pred_check_branch
          %265 = sbr.rel (%p263) target = $region28
        $region27: #{rd_model_forward.2} parent=19 // pred_region
          %s266 = sand.u32 %s88, 1
          %s267 = scalar_lea.sflag [#allocation4], %s266
          %s268 = sand.u32 %s88, 1
          %s269 = smul.addr %s268, 192
          %s270 = scalar_lea.vmem [#allocation3], %s269
          %s272 = ssub.s32 3072, 3072
          %273 = vsyncadd %s267, %s272
          %s274 = smul.addr %s27, 48
          %s275 = smul.addr %s274, 64
          %s276 = scalar_lea.hbm %s2, %s275
          %s277 = sshll.u32 %s270, 4
          %s278 = int_to_ptr.vmem [resolvable:$true] %s277
          %283 = dma.hbm_to_vmem [thread:$0]  %s276, 3072, %s278, %s267, 192, 192, 12
        $region28: #{rd_model_forward.2} parent=19 // pred_fallthru
          _
        // Predicated region
        $region29: #{rd_model_forward.2} parent=19 // pred_check
          %p284 = pneg %p124
        $region30: #{rd_model_forward.2} parent=19 // pred_check_branch
          %286 = sbr.rel (%p284) target = $region32
        $region31: #{rd_model_forward.2} parent=19 // pred_region
          %p287 = scmp.lt.s32.totalorder %s27, 1
          %s288 = scalar_select %p287, %s27, 1
          %s289 = smul.addr %s288, 16
          %s290 = smul.addr %s289, 4
          %s291 = scalar_lea.vmem %s3, %s290
        $region32: #{rd_model_forward.2} parent=19 // pred_fallthru
          _
        // Predicated region
        $region33: #{rd_model_forward.2} parent=19 // pred_check
          %p292 = pneg %p150
        $region34: #{rd_model_forward.2} parent=19 // pred_check_branch
          %294 = sbr.rel (%p292) target = $region36
        $region35: #{rd_model_forward.2} parent=19 // pred_region
          %s295 = sand.u32 %s19, 1
          %s296 = scalar_lea.sflag [#allocation6], %s295
          %s297 = sand.u32 %s140, 1
          %s298 = smul.addr %s297, 256
          %s299 = scalar_lea.vmem [#allocation5], %s298
          %s301 = ssub.s32 4096, 4096
          %302 = vsyncadd %s296, %s301
          %s303 = smul.addr %s27, 64
          %s304 = smul.addr %s303, 64
          %s305 = scalar_lea.hbm %s4, %s304
          %s306 = sshll.u32 %s299, 4
          %s307 = int_to_ptr.vmem [resolvable:$true] %s306
          %312 = dma.hbm_to_vmem [thread:$0]  %s305, 4096, %s307, %s296, 256, 256, 16
        $region36: #{rd_model_forward.2} parent=19 // pred_fallthru
          _
        // Predicated region
        $region37: #{rd_model_forward.2} parent=19 // pred_check
          %p313 = pneg %p176
        $region38: #{rd_model_forward.2} parent=19 // pred_check_branch
          %315 = sbr.rel (%p313) target = $region40
        $region39: #{rd_model_forward.2} parent=19 // pred_region
          %s316 = sand.u32 %s19, 1
          %s317 = scalar_lea.sflag [#allocation6], %s316
          %s318 = sand.u32 %s166, 1
          %s319 = smul.addr %s318, 256
          %s320 = scalar_lea.vmem [#allocation7], %s319
          %s322 = ssub.s32 4096, 4096
          %323 = vsyncadd %s317, %s322
          %s324 = smul.addr %s27, 64
          %s325 = smul.addr %s324, 64
          %s326 = scalar_lea.hbm %s5, %s325
          %s327 = sshll.u32 %s320, 4
          %s328 = int_to_ptr.vmem [resolvable:$true] %s327
          %333 = dma.hbm_to_vmem [thread:$0]  %s326, 4096, %s328, %s317, 64, 64, 4
        $region40: #{rd_model_forward.2} parent=19 // pred_fallthru
          _
        // Predicated region
        $region41: #{rd_model_forward.2} parent=19 // pred_check
          %p334 = pneg %p202
        $region42: #{rd_model_forward.2} parent=19 // pred_check_branch
          %336 = sbr.rel (%p334) target = $region44
        $region43: #{rd_model_forward.2} parent=19 // pred_region
          %p337 = scmp.lt.s32.totalorder %s27, 1
          %s338 = scalar_select %p337, %s27, 1
          %s339 = smul.addr %s338, 4
          %s340 = smul.addr %s339, 8
          %s341 = scalar_lea.vmem %s6, %s340
        $region44: #{rd_model_forward.2} parent=19 // pred_fallthru
          _
      $region20: #{rd_model_forward.2} parent=5 // pred_fallthru
        _
      %p342 = scmp.le.s32.totalorder 1, %s19
      %p343 = scmp.lt.s32.totalorder %s19, 5
      %p344 = pnand %p342, %p343
      %p345 = pneg %p344
      // Predicated region
      $region45: #{rd_model_forward.2} parent=5 // pred_check
        _
      $region46: #{rd_model_forward.2} parent=5 // pred_check_branch
        %347 = sbr.rel (%p344) target = $region48
      $region47: #{rd_model_forward.2} parent=5 // pred_region
        %s348 = ssub.s32 %s19, 1
        %s349 = sand.u32 %s91, 1
        %s350 = scalar_lea.sflag [#allocation4], %s349
        %s351 = sand.u32 %s91, 1
        %s352 = smul.addr %s351, 192
        %s353 = scalar_lea.vmem [#allocation3], %s352
        // Predicated region
        $region49: #{rd_model_forward.2} parent=47 // pred_check
          %p354 = pneg %p104
        $region50: #{rd_model_forward.2} parent=47 // pred_check_branch
          %356 = sbr.rel (%p354) target = $region52
        $region51: #{rd_model_forward.2} parent=47 // pred_region
          %357 = dma.done %s350, 3072
        $region52: #{rd_model_forward.2} parent=47 // pred_fallthru
          _
        %s358 = sand.u32 %s24, 1
        %s359 = scalar_lea.sflag [#allocation6], %s358
        %s360 = sand.u32 %s143, 1
        %s361 = smul.addr %s360, 256
        %s362 = scalar_lea.vmem [#allocation5], %s361
        // Predicated region
        $region53: #{rd_model_forward.2} parent=47 // pred_check
          %p363 = pneg %p156
        $region54: #{rd_model_forward.2} parent=47 // pred_check_branch
          %365 = sbr.rel (%p363) target = $region56
        $region55: #{rd_model_forward.2} parent=47 // pred_region
          %366 = dma.done %s359, 4096
        $region56: #{rd_model_forward.2} parent=47 // pred_fallthru
          _
        %s367 = sand.u32 %s24, 1
        %s368 = scalar_lea.sflag [#allocation6], %s367
        %s369 = sand.u32 %s169, 1
        %s370 = smul.addr %s369, 256
        %s371 = scalar_lea.vmem [#allocation7], %s370
        // Predicated region
        $region57: #{rd_model_forward.2} parent=47 // pred_check
          %p372 = pneg %p182
        $region58: #{rd_model_forward.2} parent=47 // pred_check_branch
          %374 = sbr.rel (%p372) target = $region60
        $region59: #{rd_model_forward.2} parent=47 // pred_region
          %375 = dma.done %s368, 4096
        $region60: #{rd_model_forward.2} parent=47 // pred_fallthru
          _
        %p376 = scmp.lt.s32.totalorder %s28, 1
        %s377 = scalar_select %p376, %s28, 1
        %s378 = smul.addr %s377, 8
        %s379 = scalar_lea.vmem %s0, %s378
        %p380 = pneg %p57
        %p381 = pneg %p54
        %p382 = pneg %p78
        %p383 = pneg %p75
        %s384 = sand.u32 %s91, 1
        %s385 = scalar_lea.sflag [#allocation4], %s384
        %s386 = sand.u32 %s91, 1
        %s387 = smul.addr %s386, 192
        %s388 = scalar_lea.vmem [#allocation3], %s387
        %p389 = pneg %p104
        %p390 = pneg %p101
        %p391 = scmp.lt.s32.totalorder %s29, 1
        %s392 = scalar_select %p391, %s29, 1
        %s393 = smul.addr %s392, 16
        %s394 = smul.addr %s393, 4
        %s395 = scalar_lea.vmem %s3, %s394
        %p396 = pneg %p130
        %p397 = pneg %p127
        %s398 = sand.u32 %s24, 1
        %s399 = scalar_lea.sflag [#allocation6], %s398
        %s400 = sand.u32 %s143, 1
        %s401 = smul.addr %s400, 256
        %s402 = scalar_lea.vmem [#allocation5], %s401
        %p403 = pneg %p156
        %p404 = pneg %p153
        %s405 = sand.u32 %s24, 1
        %s406 = scalar_lea.sflag [#allocation6], %s405
        %s407 = sand.u32 %s169, 1
        %s408 = smul.addr %s407, 256
        %s409 = scalar_lea.vmem [#allocation7], %s408
        %p410 = pneg %p182
        %p411 = pneg %p179
        %p412 = scmp.lt.s32.totalorder %s29, 1
        %s413 = scalar_select %p412, %s29, 1
        %s414 = smul.addr %s413, 4
        %s415 = smul.addr %s414, 8
        %s416 = scalar_lea.vmem %s6, %s415
        %p417 = pneg %p208
        %p418 = pneg %p205
        %p419 = pneg %p234
        %p420 = pneg %p231
        %p421 = scmp.lt.s32.totalorder %s28, 1
        %s422 = scalar_select %p421, %s28, 1
        %s423 = smul.addr %s422, 8
        %s424 = scalar_lea.vmem %s7, %s423
        %p425 = scmp.lt.s32.totalorder %s28, 1
        %s426 = scalar_select %p425, %s28, 1
        %s427 = smul.addr %s426, 8
        %s428 = scalar_lea.vmem %s0, %s427
        %p429 = scmp.lt.s32.totalorder %s29, 1
        %s430 = scalar_select %p429, %s29, 1
        %s431 = smul.addr %s430, 16
        %s432 = smul.addr %s431, 4
        %s433 = scalar_lea.vmem %s3, %s432
        %p434 = scmp.lt.s32.totalorder %s29, 1
        %s435 = scalar_select %p434, %s29, 1
        %s436 = smul.addr %s435, 4
        %s437 = smul.addr %s436, 8
        %s438 = scalar_lea.vmem %s6, %s437
        %p439 = scmp.lt.s32.totalorder %s28, 1
        %s440 = scalar_select %p439, %s28, 1
        %s441 = smul.addr %s440, 8
        %s442 = scalar_lea.vmem %s7, %s441
        %v444 = vld [vmem:[%s438] sm:$0xff]
        %v445 = vld [vmem:[%s438 + $0x8] sm:$0xff]
        %v446 = vld [vmem:[%s438 + $0x10] sm:$0xff]
        %v447 = vld [vmem:[%s438 + $0x18] sm:$0xff]
        %p448 = scmp.eq.s32.totalorder %s29, 0
        // Predicated region
        $region61: #{rd_model_forward.2} parent=47 // pred_check
          %p449 = pneg %p448
        $region62: #{rd_model_forward.2} parent=47 // pred_check_branch
          %451 = sbr.rel (%p449) target = $region64
        $region63: #{rd_model_forward.2} parent=47 // pred_region
          %v452 = vld [vmem:[%s428] sm:$0xff]
          %v453 = vld [vmem:[%s1] sm:$0x1]
          %v454 = vld [vmem:[%s1 + $0x1] sm:$0x1]
          %455 = vadd.xlane.f32.xlu0 %v452
          %v456 = vpop.xlane.xlu0 %455
          %v457 = vrcp.pop 128.0
          %v458 = vmul.f32 %v456, %v457
          %v459 = vsub.f32 %v452, %v458
          %v460 = vmul.f32 %v459, %v459
          %461 = vadd.xlane.f32.xlu0 %v460
          %v462 = vpop.xlane.xlu0 %461
          %v463 = vmul.f32 %v462, %v457
          %v464 = vadd.f32 %v463, 1e-05
          %v465 = vrsqrt.pop %v464
          %v466 = vmul.f32 %v459, %v465
          %v467 = vlaneseq
          %v468 = vshrl.u32 %v467, 7
          %v469 = vsub.s32 0, %v468
          %v470 = vrot.slane %v453, %v469
          %v471 = vmul.f32 %v466, %v470
          %v472 = vlaneseq
          %v473 = vshrl.u32 %v472, 7
          %v474 = vsub.s32 0, %v473
          %v475 = vrot.slane %v454, %v474
          %v476 = vadd.f32 %v471, %v475
          %v477 = vpack.c.bf16 %v476, %v476
          %478 = vst [vmem:[#allocation2] sm:$0xf] %v477
        $region64: #{rd_model_forward.2} parent=47 // pred_fallthru
          _
        %v479 = vld [vmem:[#allocation2] sm:$0xf]
        %v480 = vld [vmem:[%s353] sm:$0xff]
        %v481 = vld [vmem:[%s353 + $0x8] sm:$0xf]
        %v482 = vld [vmem:[%s353 + $0xc] sm:$0xff]
        %v483 = vld [vmem:[%s353 + $0x14] sm:$0xf]
        %v484 = vld [vmem:[%s353 + $0x18] sm:$0xff]
        %v485 = vld [vmem:[%s353 + $0x20] sm:$0xf]
        %v486 = vld [vmem:[%s353 + $0x24] sm:$0xff]
        %v487 = vld [vmem:[%s353 + $0x2c] sm:$0xf]
        %v488 = vld [vmem:[%s353 + $0x30] sm:$0xff]
        %v489 = vld [vmem:[%s353 + $0x38] sm:$0xf]
        %v490 = vld [vmem:[%s353 + $0x3c] sm:$0xff]
        %v491 = vld [vmem:[%s353 + $0x44] sm:$0xf]
        %v492 = vld [vmem:[%s353 + $0x48] sm:$0xff]
        %v493 = vld [vmem:[%s353 + $0x50] sm:$0xf]
        %v494 = vld [vmem:[%s353 + $0x54] sm:$0xff]
        %v495 = vld [vmem:[%s353 + $0x5c] sm:$0xf]
        %v496 = vld [vmem:[%s353 + $0x60] sm:$0xff]
        %v497 = vld [vmem:[%s353 + $0x68] sm:$0xf]
        %v498 = vld [vmem:[%s353 + $0x6c] sm:$0xff]
        %v499 = vld [vmem:[%s353 + $0x74] sm:$0xf]
        %v500 = vld [vmem:[%s353 + $0x78] sm:$0xff]
        %v501 = vld [vmem:[%s353 + $0x80] sm:$0xf]
        %v502 = vld [vmem:[%s353 + $0x84] sm:$0xff]
        %v503 = vld [vmem:[%s353 + $0x8c] sm:$0xf]
        %v504 = vld [vmem:[%s353 + $0x90] sm:$0xff]
        %v505 = vld [vmem:[%s353 + $0x98] sm:$0xf]
        %v506 = vld [vmem:[%s353 + $0x9c] sm:$0xff]
        %v507 = vld [vmem:[%s353 + $0xa4] sm:$0xf]
        %v508 = vld [vmem:[%s353 + $0xa8] sm:$0xff]
        %v509 = vld [vmem:[%s353 + $0xb0] sm:$0xf]
        %v510 = vld [vmem:[%s353 + $0xb4] sm:$0xff]
        %v511 = vld [vmem:[%s353 + $0xbc] sm:$0xf]
        %v512 = vlaneseq
        %v513 = vshrl.u32 %v512, 7
        %v514 = vsub.s32 0, %v513
        %v515 = vrot.slane %v444, %v514
        %v516 = vlaneseq
        %v517 = vshrl.u32 %v516, 7
        %v518 = vsub.s32 0, %v517
        %v519 = vrot.slane %v445, %v518
        %v520 = vlaneseq
        %v521 = vshrl.u32 %v520, 7
        %v522 = vsub.s32 0, %v521
        %v523 = vrot.slane %v446, %v522
        %v556 = vunpack.c.l.b16 %v480
        %v557 = vunpack.c.h.b16 %v480
        %v558 = vunpack.c.l.b16 %v481
        %v559 = vunpack.c.l.b16 %v482
        %v560 = vunpack.c.h.b16 %v482
        %v561 = vunpack.c.l.b16 %v483
        %v562 = vunpack.c.l.b16 %v484
        %v563 = vunpack.c.h.b16 %v484
        %v564 = vunpack.c.l.b16 %v485
        %v565 = vunpack.c.l.b16 %v486
        %v566 = vunpack.c.h.b16 %v486
        %v567 = vunpack.c.l.b16 %v487
        %v568 = vunpack.c.l.b16 %v488
        %v569 = vunpack.c.h.b16 %v488
        %v570 = vunpack.c.l.b16 %v489
        %v571 = vunpack.c.l.b16 %v490
        %v572 = vunpack.c.h.b16 %v490
        %v573 = vunpack.c.l.b16 %v491
        %v574 = vunpack.c.l.b16 %v492
        %v575 = vunpack.c.h.b16 %v492
        %v576 = vunpack.c.l.b16 %v493
        %v577 = vunpack.c.l.b16 %v494
        %v578 = vunpack.c.h.b16 %v494
        %v579 = vunpack.c.l.b16 %v495
        %v580 = vunpack.c.l.b16 %v496
        %v581 = vunpack.c.h.b16 %v496
        %v582 = vunpack.c.l.b16 %v497
        %v583 = vunpack.c.l.b16 %v498
        %v584 = vunpack.c.h.b16 %v498
        %v585 = vunpack.c.l.b16 %v499
        %v586 = vunpack.c.l.b16 %v500
        %v587 = vunpack.c.h.b16 %v500
        %v588 = vunpack.c.l.b16 %v501
        %v589 = vunpack.c.l.b16 %v502
        %v590 = vunpack.c.h.b16 %v502
        %v591 = vunpack.c.l.b16 %v503
        %v592 = vunpack.c.l.b16 %v504
        %v593 = vunpack.c.h.b16 %v504
        %v594 = vunpack.c.l.b16 %v505
        %v595 = vunpack.c.l.b16 %v506
        %v596 = vunpack.c.h.b16 %v506
        %v597 = vunpack.c.l.b16 %v507
        %v598 = vunpack.c.l.b16 %v508
        %v599 = vunpack.c.h.b16 %v508
        %v600 = vunpack.c.l.b16 %v509
        %v601 = vunpack.c.l.b16 %v510
        %v602 = vunpack.c.h.b16 %v510
        %v603 = vunpack.c.l.b16 %v511
        %v604 = vpack.c.b16 %v559, %v556
        %v605 = vpack.c.b16 %v560, %v557
        %v606 = vpack.c.b16 %v561, %v558
        %v607 = vpack.c.b16 %v565, %v562
        %v608 = vpack.c.b16 %v566, %v563
        %v609 = vpack.c.b16 %v567, %v564
        %v610 = vpack.c.b16 %v571, %v568
        %v611 = vpack.c.b16 %v572, %v569
        %v612 = vpack.c.b16 %v573, %v570
        %v613 = vpack.c.b16 %v577, %v574
        %v614 = vpack.c.b16 %v578, %v575
        %v615 = vpack.c.b16 %v579, %v576
        %v616 = vpack.c.b16 %v583, %v580
        %v617 = vpack.c.b16 %v584, %v581
        %v618 = vpack.c.b16 %v585, %v582
        %v619 = vpack.c.b16 %v589, %v586
        %v620 = vpack.c.b16 %v590, %v587
        %v621 = vpack.c.b16 %v591, %v588
        %v622 = vpack.c.b16 %v595, %v592
        %v623 = vpack.c.b16 %v596, %v593
        %v624 = vpack.c.b16 %v597, %v594
        %v625 = vpack.c.b16 %v601, %v598
        %v626 = vpack.c.b16 %v602, %v599
        %v627 = vpack.c.b16 %v603, %v600
        %652 = vmatprep.subr.bf16.mxu0 %v626
        %653 = vmatpush1.bf16.msra.mxu0 %v625
        %654 = vmatprep.subr.bf16.mxu0 %v623
        %655 = vmatpush1.bf16.msra.mxu0 %v622
        %656 = vmatprep.subr.bf16.mxu0 %v620
        %657 = vmatpush1.bf16.msra.mxu0 %v619
        %658 = vmatprep.subr.bf16.mxu0 %v617
        %659 = vmatpush1.bf16.msra.mxu0 %v616
        %660 = vmatprep.subr.bf16.mxu0 %v614
        %661 = vmatpush1.bf16.msra.mxu0 %v613
        %662 = vmatprep.subr.bf16.mxu0 %v611
        %663 = vmatpush1.bf16.msra.mxu0 %v610
        %664 = vmatprep.subr.bf16.mxu0 %v608
        %665 = vmatpush1.bf16.msra.mxu0 %v607
        %666 = vmatprep.subr.bf16.mxu0 %v605
        %667 = vmatpush1.bf16.msra.mxu0 %v604
        %668 = vmatprep.subr.bf16.mxu0 0
        %669 = vmatpush2.bf16.msra.mxu0 0
        %670 = vmatprep.subr.bf16.mxu0 0
        %671 = vmatpush2.bf16.msra.mxu0 0
        %672 = vmatprep.subr.bf16.mxu0 0
        %673 = vmatpush2.bf16.msra.mxu0 0
        %674 = vmatprep.subr.bf16.mxu0 0
        %675 = vmatpush2.bf16.msra.mxu0 0
        %676 = vmatprep.subr.bf16.mxu0 0
        %677 = vmatpush2.bf16.msra.mxu0 0
        %678 = vmatprep.subr.bf16.mxu0 0
        %679 = vmatpush2.bf16.msra.mxu0 0
        %680 = vmatprep.subr.bf16.mxu0 0
        %681 = vmatpush2.bf16.msra.mxu0 0
        %682 = vmatprep.subr.bf16.mxu0 0
        %683 = vmatpush2.bf16.msra.mxu0 0
        %684 = vmatprep.mubr.bf16.mxu0 0
        %685 = vmatmul.mubr.bf16.gmra.mxu0 %v479
        %v686 = vpop.f32.mrf.mxu0
        %v687 = vadd.f32 %v515, %v686
        %v688 = vpop.f32.mrf.mxu0
        %v689 = vadd.f32 %v519, %v688
        %v690 = vpop.f32.mrf.mxu0
        %v691 = vpop.f32.mrf.mxu0
        %692 = vdwg.mxu0
        %693 = vmatprep.subr.bf16.mxu0 0
        %694 = vmatpush1.bf16.msra.mxu0 %v627
        %695 = vmatprep.subr.bf16.mxu0 0
        %696 = vmatpush1.bf16.msra.mxu0 %v624
        %697 = vmatprep.subr.bf16.mxu0 0
        %698 = vmatpush1.bf16.msra.mxu0 %v621
        %699 = vmatprep.subr.bf16.mxu0 0
        %700 = vmatpush1.bf16.msra.mxu0 %v618
        %701 = vmatprep.subr.bf16.mxu0 0
        %702 = vmatpush1.bf16.msra.mxu0 %v615
        %703 = vmatprep.subr.bf16.mxu0 0
        %704 = vmatpush1.bf16.msra.mxu0 %v612
        %705 = vmatprep.subr.bf16.mxu0 0
        %706 = vmatpush1.bf16.msra.mxu0 %v609
        %707 = vmatprep.subr.bf16.mxu0 0
        %708 = vmatpush1.bf16.msra.mxu0 %v606
        %709 = vmatprep.subr.bf16.mxu0 0
        %710 = vmatpush2.bf16.msra.mxu0 0
        %711 = vmatprep.subr.bf16.mxu0 0
        %712 = vmatpush2.bf16.msra.mxu0 0
        %713 = vmatprep.subr.bf16.mxu0 0
        %714 = vmatpush2.bf16.msra.mxu0 0
        %715 = vmatprep.subr.bf16.mxu0 0
        %716 = vmatpush2.bf16.msra.mxu0 0
        %717 = vmatprep.subr.bf16.mxu0 0
        %718 = vmatpush2.bf16.msra.mxu0 0
        %719 = vmatprep.subr.bf16.mxu0 0
        %720 = vmatpush2.bf16.msra.mxu0 0
        %721 = vmatprep.subr.bf16.mxu0 0
        %722 = vmatpush2.bf16.msra.mxu0 0
        %723 = vmatprep.subr.bf16.mxu0 0
        %724 = vmatpush2.bf16.msra.mxu0 0
        %725 = vmatprep.mubr.bf16.mxu0 0
        %726 = vmatmul.mubr.bf16.gmra.mxu0 %v479
        %v727 = vpop.f32.mrf.mxu0
        %v728 = vadd.f32 %v523, %v727
        %v729 = vpop.f32.mrf.mxu0
        %v730 = vpop.f32.mrf.mxu0
        %v731 = vpop.f32.mrf.mxu0
        %732 = vdwg.mxu0
        %735 = vrot.lane.b32.xlu0 %v687, 32
        %v736 = vpop.permute.xlu0 %735
        %737 = vrot.lane.b32.xlu0 %v689, 32
        %v738 = vpop.permute.xlu0 %737
        %vm739 = vcmask 261120
        %v740 = vsel %vm739, %v736, %v738
        %743 = vrot.lane.b32.xlu0 %v689, 64
        %v744 = vpop.permute.xlu0 %743
        %745 = vrot.lane.b32.xlu0 %v728, 64
        %v746 = vpop.permute.xlu0 %745
        %vm747 = vcmask 523264
        %v748 = vsel %vm747, %v744, %v746
        %750 = vrot.lane.b32.xlu0 %v728, 96
        %v751 = vpop.permute.xlu0 %750
        %v753 = vcombine.low %v687, %v748
        %v754 = vcombine.high %v687, %v748
        %v756 = vunpack.c.l.s4 1983009808
        %v757 = vunpack.c.0.s8 %v756
        %v758 = vlaneseq
        %v759 = vshrl.u32 %v758, 7
        %v760 = vsub.s32 %v757, %v759
        %v761 = vrot.slane %v753, %v760
        %v763 = vunpack.c.l.s4 1983009808
        %v764 = vunpack.c.0.s8 %v763
        %v765 = vlaneseq
        %v766 = vshrl.u32 %v765, 7
        %v767 = vsub.s32 %v764, %v766
        %v768 = vrot.slane %v754, %v767
        %v769 = vcombine.low %v740, %v751
        %v770 = vcombine.high %v740, %v751
        %v772 = vunpack.c.l.s4 1983009808
        %v773 = vunpack.c.0.s8 %v772
        %v774 = vlaneseq
        %v775 = vshrl.u32 %v774, 7
        %v776 = vsub.s32 %v773, %v775
        %v777 = vrot.slane %v769, %v776
        %v779 = vunpack.c.l.s4 1983009808
        %v780 = vunpack.c.0.s8 %v779
        %v781 = vlaneseq
        %v782 = vshrl.u32 %v781, 7
        %v783 = vsub.s32 %v780, %v782
        %v784 = vrot.slane %v770, %v783
        %v785 = vcombine.low %v761, %v777
        %v786 = vcombine.high %v761, %v777
        %v788 = vunpack.c.l.s4 1934713408
        %v789 = vunpack.c.0.s8 %v788
        %v790 = vlaneseq
        %v791 = vshrl.u32 %v790, 7
        %v792 = vsub.s32 %v789, %v791
        %v793 = vrot.slane %v785, %v792
        %v795 = vunpack.c.l.s4 1934713408
        %v796 = vunpack.c.0.s8 %v795
        %v797 = vlaneseq
        %v798 = vshrl.u32 %v797, 7
        %v799 = vsub.s32 %v796, %v798
        %v800 = vrot.slane %v786, %v799
        %v801 = vcombine.low %v768, %v784
        %v802 = vcombine.high %v768, %v784
        %v804 = vunpack.c.l.s4 1934713408
        %v805 = vunpack.c.0.s8 %v804
        %v806 = vlaneseq
        %v807 = vshrl.u32 %v806, 7
        %v808 = vsub.s32 %v805, %v807
        %v809 = vrot.slane %v801, %v808
        %v811 = vunpack.c.l.s4 1934713408
        %v812 = vunpack.c.0.s8 %v811
        %v813 = vlaneseq
        %v814 = vshrl.u32 %v813, 7
        %v815 = vsub.s32 %v812, %v814
        %v816 = vrot.slane %v802, %v815
        %v817 = vcombine.high %v793, 0.0
        %v818 = vcombine.high %v800, 0.0
        %v819 = vcombine.high %v809, 0.0
        %v820 = vcombine.high %v816, 0.0
        %v821 = vcombine.low %v793, %v800
        %v823 = vunpack.c.l.s4 1983009808
        %v824 = vunpack.c.0.s8 %v823
        %v825 = vlaneseq
        %v826 = vshrl.u32 %v825, 7
        %v827 = vsub.s32 %v824, %v826
        %v828 = vrot.slane %v821, %v827
        %v829 = vcombine.low %v817, %v818
        %v831 = vunpack.c.l.s4 1983009808
        %v832 = vunpack.c.0.s8 %v831
        %v833 = vlaneseq
        %v834 = vshrl.u32 %v833, 7
        %v835 = vsub.s32 %v832, %v834
        %v836 = vrot.slane %v829, %v835
        %v837 = vcombine.low %v809, %v816
        %v839 = vunpack.c.l.s4 1983009808
        %v840 = vunpack.c.0.s8 %v839
        %v841 = vlaneseq
        %v842 = vshrl.u32 %v841, 7
        %v843 = vsub.s32 %v840, %v842
        %v844 = vrot.slane %v837, %v843
        %v845 = vcombine.low %v819, %v820
        %v847 = vunpack.c.l.s4 1983009808
        %v848 = vunpack.c.0.s8 %v847
        %v849 = vlaneseq
        %v850 = vshrl.u32 %v849, 7
        %v851 = vsub.s32 %v848, %v850
        %v852 = vrot.slane %v845, %v851
        %v853 = vcombine.low %v828, %v836
        %v854 = vcombine.high %v828, %v836
        %v856 = vunpack.c.l.s4 1934713408
        %v857 = vunpack.c.0.s8 %v856
        %v858 = vlaneseq
        %v859 = vshrl.u32 %v858, 7
        %v860 = vsub.s32 %v857, %v859
        %v861 = vrot.slane %v853, %v860
        %v863 = vunpack.c.l.s4 1934713408
        %v864 = vunpack.c.0.s8 %v863
        %v865 = vlaneseq
        %v866 = vshrl.u32 %v865, 7
        %v867 = vsub.s32 %v864, %v866
        %v868 = vrot.slane %v854, %v867
        %v869 = vcombine.low %v844, %v852
        %v870 = vcombine.high %v844, %v852
        %v872 = vunpack.c.l.s4 1934713408
        %v873 = vunpack.c.0.s8 %v872
        %v874 = vlaneseq
        %v875 = vshrl.u32 %v874, 7
        %v876 = vsub.s32 %v873, %v875
        %v877 = vrot.slane %v869, %v876
        %v879 = vunpack.c.l.s4 1934713408
        %v880 = vunpack.c.0.s8 %v879
        %v881 = vlaneseq
        %v882 = vshrl.u32 %v881, 7
        %v883 = vsub.s32 %v880, %v882
        %v884 = vrot.slane %v870, %v883
        %v885 = vcombine.low %v861, %v877
        %v886 = vcombine.high %v861, %v877
        %v887 = vcombine.low %v868, %v884
        %v888 = vcombine.high %v868, %v884
        %v889 = vmul.f32 %v885, 0.17677669
        %v890 = vmul.f32 %v886, 0.17677669
        %v891 = vmul.f32 %v887, 0.17677669
        %v892 = vmul.f32 %v888, 0.17677669
        %v893 = vpack.c.bf16 %v889, %v889
        %v894 = vpack.c.bf16 %v890, %v890
        %v895 = vpack.c.bf16 %v891, %v891
        %v896 = vpack.c.bf16 %v892, %v892
        %v897 = vpack.c.bf16 %v885, %v885
        %v898 = vpack.c.bf16 %v886, %v886
        %v899 = vpack.c.bf16 %v887, %v887
        %v900 = vpack.c.bf16 %v888, %v888
        %902 = vrot.lane.b32.xlu0 %v897, 96
        %v903 = vpop.permute.xlu0 %902
        %v905 = vsel %vm739, %v893, 0
        %v908 = vsel %vm739, %v903, 0
        %910 = vmatprep.subr.bf16.mxu0 0
        %911 = vmatpush1.bf16.xpose.msra.mxu0 0
        %912 = vmatprep.subr.bf16.mxu0 0
        %913 = vmatpush1.bf16.xpose.msra.mxu0 0
        %914 = vmatprep.subr.bf16.mxu0 0
        %915 = vmatpush1.bf16.xpose.msra.mxu0 0
        %916 = vmatprep.subr.bf16.mxu0 0
        %917 = vmatpush1.bf16.xpose.msra.mxu0 0
        %918 = vmatprep.subr.bf16.mxu0 0
        %919 = vmatpush1.bf16.xpose.msra.mxu0 0
        %920 = vmatprep.subr.bf16.mxu0 0
        %921 = vmatpush1.bf16.xpose.msra.mxu0 0
        %922 = vmatprep.subr.bf16.mxu0 0
        %923 = vmatpush1.bf16.xpose.msra.mxu0 0
        %924 = vmatprep.subr.bf16.mxu0 0
        %925 = vmatpush1.bf16.xpose.msra.mxu0 %v908
        %926 = vmatprep.subr.bf16.mxu0 0
        %927 = vmatpush2.bf16.xpose.msra.mxu0 0
        %928 = vmatprep.subr.bf16.mxu0 0
        %929 = vmatpush2.bf16.xpose.msra.mxu0 0
        %930 = vmatprep.subr.bf16.mxu0 0
        %931 = vmatpush2.bf16.xpose.msra.mxu0 0
        %932 = vmatprep.subr.bf16.mxu0 0
        %933 = vmatpush2.bf16.xpose.msra.mxu0 0
        %934 = vmatprep.subr.bf16.mxu0 0
        %935 = vmatpush2.bf16.xpose.msra.mxu0 0
        %936 = vmatprep.subr.bf16.mxu0 0
        %937 = vmatpush2.bf16.xpose.msra.mxu0 0
        %938 = vmatprep.subr.bf16.mxu0 0
        %939 = vmatpush2.bf16.xpose.msra.mxu0 0
        %940 = vmatprep.subr.bf16.mxu0 0
        %941 = vmatpush2.bf16.xpose.msra.mxu0 0
        %942 = vmatprep.mubr.bf16.mxu0 0
        %943 = vmatmul.mubr.bf16.gmra.mxu0 %v905
        %v944 = vpop.f32.mrf.mxu0
        %v945 = vadd.f32 0.0, %v944
        %v946 = vpop.f32.mrf.mxu0
        %v947 = vpop.f32.mrf.mxu0
        %v948 = vpop.f32.mrf.mxu0
        %949 = vdwg.mxu0
        %951 = vrot.lane.b32.xlu0 %v898, 96
        %v952 = vpop.permute.xlu0 %951
        %v954 = vsel %vm739, %v894, 0
        %v957 = vsel %vm739, %v952, 0
        %959 = vmatprep.subr.bf16.mxu0 0
        %960 = vmatpush1.bf16.xpose.msra.mxu0 0
        %961 = vmatprep.subr.bf16.mxu0 0
        %962 = vmatpush1.bf16.xpose.msra.mxu0 0
        %963 = vmatprep.subr.bf16.mxu0 0
        %964 = vmatpush1.bf16.xpose.msra.mxu0 0
        %965 = vmatprep.subr.bf16.mxu0 0
        %966 = vmatpush1.bf16.xpose.msra.mxu0 0
        %967 = vmatprep.subr.bf16.mxu0 0
        %968 = vmatpush1.bf16.xpose.msra.mxu0 0
        %969 = vmatprep.subr.bf16.mxu0 0
        %970 = vmatpush1.bf16.xpose.msra.mxu0 0
        %971 = vmatprep.subr.bf16.mxu0 0
        %972 = vmatpush1.bf16.xpose.msra.mxu0 0
        %973 = vmatprep.subr.bf16.mxu0 0
        %974 = vmatpush1.bf16.xpose.msra.mxu0 %v957
        %975 = vmatprep.subr.bf16.mxu0 0
        %976 = vmatpush2.bf16.xpose.msra.mxu0 0
        %977 = vmatprep.subr.bf16.mxu0 0
        %978 = vmatpush2.bf16.xpose.msra.mxu0 0
        %979 = vmatprep.subr.bf16.mxu0 0
        %980 = vmatpush2.bf16.xpose.msra.mxu0 0
        %981 = vmatprep.subr.bf16.mxu0 0
        %982 = vmatpush2.bf16.xpose.msra.mxu0 0
        %983 = vmatprep.subr.bf16.mxu0 0
        %984 = vmatpush2.bf16.xpose.msra.mxu0 0
        %985 = vmatprep.subr.bf16.mxu0 0
        %986 = vmatpush2.bf16.xpose.msra.mxu0 0
        %987 = vmatprep.subr.bf16.mxu0 0
        %988 = vmatpush2.bf16.xpose.msra.mxu0 0
        %989 = vmatprep.subr.bf16.mxu0 0
        %990 = vmatpush2.bf16.xpose.msra.mxu0 0
        %991 = vmatprep.mubr.bf16.mxu0 0
        %992 = vmatmul.mubr.bf16.gmra.mxu0 %v954
        %v993 = vpop.f32.mrf.mxu0
        %v994 = vadd.f32 0.0, %v993
        %v995 = vpop.f32.mrf.mxu0
        %v996 = vpop.f32.mrf.mxu0
        %v997 = vpop.f32.mrf.mxu0
        %998 = vdwg.mxu0
        %1000 = vrot.lane.b32.xlu0 %v899, 96
        %v1001 = vpop.permute.xlu0 %1000
        %v1003 = vsel %vm739, %v895, 0
        %v1006 = vsel %vm739, %v1001, 0
        %1008 = vmatprep.subr.bf16.mxu0 0
        %1009 = vmatpush1.bf16.xpose.msra.mxu0 0
        %1010 = vmatprep.subr.bf16.mxu0 0
        %1011 = vmatpush1.bf16.xpose.msra.mxu0 0
        %1012 = vmatprep.subr.bf16.mxu0 0
        %1013 = vmatpush1.bf16.xpose.msra.mxu0 0
        %1014 = vmatprep.subr.bf16.mxu0 0
        %1015 = vmatpush1.bf16.xpose.msra.mxu0 0
        %1016 = vmatprep.subr.bf16.mxu0 0
        %1017 = vmatpush1.bf16.xpose.msra.mxu0 0
        %1018 = vmatprep.subr.bf16.mxu0 0
        %1019 = vmatpush1.bf16.xpose.msra.mxu0 0
        %1020 = vmatprep.subr.bf16.mxu0 0
        %1021 = vmatpush1.bf16.xpose.msra.mxu0 0
        %1022 = vmatprep.subr.bf16.mxu0 0
        %1023 = vmatpush1.bf16.xpose.msra.mxu0 %v1006
        %1024 = vmatprep.subr.bf16.mxu0 0
        %1025 = vmatpush2.bf16.xpose.msra.mxu0 0
        %1026 = vmatprep.subr.bf16.mxu0 0
        %1027 = vmatpush2.bf16.xpose.msra.mxu0 0
        %1028 = vmatprep.subr.bf16.mxu0 0
        %1029 = vmatpush2.bf16.xpose.msra.mxu0 0
        %1030 = vmatprep.subr.bf16.mxu0 0
        %1031 = vmatpush2.bf16.xpose.msra.mxu0 0
        %1032 = vmatprep.subr.bf16.mxu0 0
        %1033 = vmatpush2.bf16.xpose.msra.mxu0 0
        %1034 = vmatprep.subr.bf16.mxu0 0
        %1035 = vmatpush2.bf16.xpose.msra.mxu0 0
        %1036 = vmatprep.subr.bf16.mxu0 0
        %1037 = vmatpush2.bf16.xpose.msra.mxu0 0
        %1038 = vmatprep.subr.bf16.mxu0 0
        %1039 = vmatpush2.bf16.xpose.msra.mxu0 0
        %1040 = vmatprep.mubr.bf16.mxu0 0
        %1041 = vmatmul.mubr.bf16.gmra.mxu0 %v1003
        %v1042 = vpop.f32.mrf.mxu0
        %v1043 = vadd.f32 0.0, %v1042
        %v1044 = vpop.f32.mrf.mxu0
        %v1045 = vpop.f32.mrf.mxu0
        %v1046 = vpop.f32.mrf.mxu0
        %1047 = vdwg.mxu0
        %1049 = vrot.lane.b32.xlu0 %v900, 96
        %v1050 = vpop.permute.xlu0 %1049
        %v1052 = vsel %vm739, %v896, 0
        %v1055 = vsel %vm739, %v1050, 0
        %1057 = vmatprep.subr.bf16.mxu0 0
        %1058 = vmatpush1.bf16.xpose.msra.mxu0 0
        %1059 = vmatprep.subr.bf16.mxu0 0
        %1060 = vmatpush1.bf16.xpose.msra.mxu0 0
        %1061 = vmatprep.subr.bf16.mxu0 0
        %1062 = vmatpush1.bf16.xpose.msra.mxu0 0
        %1063 = vmatprep.subr.bf16.mxu0 0
        %1064 = vmatpush1.bf16.xpose.msra.mxu0 0
        %1065 = vmatprep.subr.bf16.mxu0 0
        %1066 = vmatpush1.bf16.xpose.msra.mxu0 0
        %1067 = vmatprep.subr.bf16.mxu0 0
        %1068 = vmatpush1.bf16.xpose.msra.mxu0 0
        %1069 = vmatprep.subr.bf16.mxu0 0
        %1070 = vmatpush1.bf16.xpose.msra.mxu0 0
        %1071 = vmatprep.subr.bf16.mxu0 0
        %1072 = vmatpush1.bf16.xpose.msra.mxu0 %v1055
        %1073 = vmatprep.subr.bf16.mxu0 0
        %1074 = vmatpush2.bf16.xpose.msra.mxu0 0
        %1075 = vmatprep.subr.bf16.mxu0 0
        %1076 = vmatpush2.bf16.xpose.msra.mxu0 0
        %1077 = vmatprep.subr.bf16.mxu0 0
        %1078 = vmatpush2.bf16.xpose.msra.mxu0 0
        %1079 = vmatprep.subr.bf16.mxu0 0
        %1080 = vmatpush2.bf16.xpose.msra.mxu0 0
        %1081 = vmatprep.subr.bf16.mxu0 0
        %1082 = vmatpush2.bf16.xpose.msra.mxu0 0
        %1083 = vmatprep.subr.bf16.mxu0 0
        %1084 = vmatpush2.bf16.xpose.msra.mxu0 0
        %1085 = vmatprep.subr.bf16.mxu0 0
        %1086 = vmatpush2.bf16.xpose.msra.mxu0 0
        %1087 = vmatprep.subr.bf16.mxu0 0
        %1088 = vmatpush2.bf16.xpose.msra.mxu0 0
        %1089 = vmatprep.mubr.bf16.mxu0 0
        %1090 = vmatmul.mubr.bf16.gmra.mxu0 %v1052
        %v1091 = vpop.f32.mrf.mxu0
        %v1092 = vadd.f32 0.0, %v1091
        %v1093 = vpop.f32.mrf.mxu0
        %v1094 = vpop.f32.mrf.mxu0
        %v1095 = vpop.f32.mrf.mxu0
        %1096 = vdwg.mxu0
        %vm1097 = vcmask 64512
        %v1098 = vsel %vm1097, %v945, -inf
        %1099 = vmax.xlane.f32.xlu0 %v1098
        %v1100 = vpop.xlane.xlu0 %1099
        %v1101 = vsel %vm1097, %v994, -inf
        %1102 = vmax.xlane.f32.xlu0 %v1101
        %v1103 = vpop.xlane.xlu0 %1102
        %v1104 = vsel %vm1097, %v1043, -inf
        %1105 = vmax.xlane.f32.xlu0 %v1104
        %v1106 = vpop.xlane.xlu0 %1105
        %v1107 = vsel %vm1097, %v1092, -inf
        %1108 = vmax.xlane.f32.xlu0 %v1107
        %v1109 = vpop.xlane.xlu0 %1108
        %v1110 = vsub.f32 %v945, %v1100
        %v1111 = vsub.f32 %v994, %v1103
        %v1112 = vsub.f32 %v1043, %v1106
        %v1113 = vsub.f32 %v1092, %v1109
        %v1114 = vmul.f32 %v1110, 1.442695
        %v1115 = vpow.pop %v1114
        %v1116 = vmul.f32 %v1111, 1.442695
        %v1117 = vpow.pop %v1116
        %v1118 = vmul.f32 %v1112, 1.442695
        %v1119 = vpow.pop %v1118
        %v1120 = vmul.f32 %v1113, 1.442695
        %v1121 = vpow.pop %v1120
        %v1122 = vsel %vm1097, %v1115, 0.0
        %1123 = vadd.xlane.f32.xlu0 %v1122
        %v1124 = vpop.xlane.xlu0 %1123
        %v1125 = vsel %vm1097, %v1117, 0.0
        %1126 = vadd.xlane.f32.xlu0 %v1125
        %v1127 = vpop.xlane.xlu0 %1126
        %v1128 = vsel %vm1097, %v1119, 0.0
        %1129 = vadd.xlane.f32.xlu0 %v1128
        %v1130 = vpop.xlane.xlu0 %1129
        %v1131 = vsel %vm1097, %v1121, 0.0
        %1132 = vadd.xlane.f32.xlu0 %v1131
        %v1133 = vpop.xlane.xlu0 %1132
        %v1134 = vrcp.pop %v1124
        %v1135 = vrcp.pop %v1127
        %v1136 = vrcp.pop %v1130
        %v1137 = vrcp.pop %v1133
        %v1138 = vmul.f32 %v1115, %v1134
        %v1139 = vmul.f32 %v1117, %v1135
        %v1140 = vmul.f32 %v1119, %v1136
        %v1141 = vmul.f32 %v1121, %v1137
        %v1142 = vpack.c.bf16 %v1138, %v1138
        %v1143 = vpack.c.bf16 %v1139, %v1139
        %v1144 = vpack.c.bf16 %v1140, %v1140
        %v1145 = vpack.c.bf16 %v1141, %v1141
        %1146 = vrot.lane.b32.xlu0 %v897, 64
        %v1147 = vpop.permute.xlu0 %1146
        %v1149 = vsel %vm1097, %v1142, 0
        %vm1151 = vcmask 1043456
        %v1153 = vsel %vm1151, %v1147, 0
        %1155 = vmatprep.subr.bf16.mxu0 0
        %1156 = vmatpush1.bf16.msra.mxu0 0
        %1157 = vmatprep.subr.bf16.mxu0 0
        %1158 = vmatpush1.bf16.msra.mxu0 0
        %1159 = vmatprep.subr.bf16.mxu0 0
        %1160 = vmatpush1.bf16.msra.mxu0 0
        %1161 = vmatprep.subr.bf16.mxu0 0
        %1162 = vmatpush1.bf16.msra.mxu0 0
        %1163 = vmatprep.subr.bf16.mxu0 0
        %1164 = vmatpush1.bf16.msra.mxu0 0
        %1165 = vmatprep.subr.bf16.mxu0 0
        %1166 = vmatpush1.bf16.msra.mxu0 0
        %1167 = vmatprep.subr.bf16.mxu0 0
        %1168 = vmatpush1.bf16.msra.mxu0 0
        %1169 = vmatprep.subr.bf16.mxu0 0
        %1170 = vmatpush1.bf16.msra.mxu0 %v1153
        %1171 = vmatprep.subr.bf16.mxu0 0
        %1172 = vmatpush2.bf16.msra.mxu0 0
        %1173 = vmatprep.subr.bf16.mxu0 0
        %1174 = vmatpush2.bf16.msra.mxu0 0
        %1175 = vmatprep.subr.bf16.mxu0 0
        %1176 = vmatpush2.bf16.msra.mxu0 0
        %1177 = vmatprep.subr.bf16.mxu0 0
        %1178 = vmatpush2.bf16.msra.mxu0 0
        %1179 = vmatprep.subr.bf16.mxu0 0
        %1180 = vmatpush2.bf16.msra.mxu0 0
        %1181 = vmatprep.subr.bf16.mxu0 0
        %1182 = vmatpush2.bf16.msra.mxu0 0
        %1183 = vmatprep.subr.bf16.mxu0 0
        %1184 = vmatpush2.bf16.msra.mxu0 0
        %1185 = vmatprep.subr.bf16.mxu0 0
        %1186 = vmatpush2.bf16.msra.mxu0 0
        %1187 = vmatprep.mubr.bf16.mxu0 0
        %1188 = vmatmul.mubr.bf16.gmra.mxu0 %v1149
        %v1189 = vpop.f32.mrf.mxu0
        %v1190 = vadd.f32 0.0, %v1189
        %v1191 = vpop.f32.mrf.mxu0
        %v1192 = vpop.f32.mrf.mxu0
        %v1193 = vpop.f32.mrf.mxu0
        %1194 = vdwg.mxu0
        %1195 = vrot.lane.b32.xlu0 %v898, 64
        %v1196 = vpop.permute.xlu0 %1195
        %v1198 = vsel %vm1097, %v1143, 0
        %v1201 = vsel %vm1151, %v1196, 0
        %1203 = vmatprep.subr.bf16.mxu0 0
        %1204 = vmatpush1.bf16.msra.mxu0 0
        %1205 = vmatprep.subr.bf16.mxu0 0
        %1206 = vmatpush1.bf16.msra.mxu0 0
        %1207 = vmatprep.subr.bf16.mxu0 0
        %1208 = vmatpush1.bf16.msra.mxu0 0
        %1209 = vmatprep.subr.bf16.mxu0 0
        %1210 = vmatpush1.bf16.msra.mxu0 0
        %1211 = vmatprep.subr.bf16.mxu0 0
        %1212 = vmatpush1.bf16.msra.mxu0 0
        %1213 = vmatprep.subr.bf16.mxu0 0
        %1214 = vmatpush1.bf16.msra.mxu0 0
        %1215 = vmatprep.subr.bf16.mxu0 0
        %1216 = vmatpush1.bf16.msra.mxu0 0
        %1217 = vmatprep.subr.bf16.mxu0 0
        %1218 = vmatpush1.bf16.msra.mxu0 %v1201
        %1219 = vmatprep.subr.bf16.mxu0 0
        %1220 = vmatpush2.bf16.msra.mxu0 0
        %1221 = vmatprep.subr.bf16.mxu0 0
        %1222 = vmatpush2.bf16.msra.mxu0 0
        %1223 = vmatprep.subr.bf16.mxu0 0
        %1224 = vmatpush2.bf16.msra.mxu0 0
        %1225 = vmatprep.subr.bf16.mxu0 0
        %1226 = vmatpush2.bf16.msra.mxu0 0
        %1227 = vmatprep.subr.bf16.mxu0 0
        %1228 = vmatpush2.bf16.msra.mxu0 0
        %1229 = vmatprep.subr.bf16.mxu0 0
        %1230 = vmatpush2.bf16.msra.mxu0 0
        %1231 = vmatprep.subr.bf16.mxu0 0
        %1232 = vmatpush2.bf16.msra.mxu0 0
        %1233 = vmatprep.subr.bf16.mxu0 0
        %1234 = vmatpush2.bf16.msra.mxu0 0
        %1235 = vmatprep.mubr.bf16.mxu0 0
        %1236 = vmatmul.mubr.bf16.gmra.mxu0 %v1198
        %v1237 = vpop.f32.mrf.mxu0
        %v1238 = vadd.f32 0.0, %v1237
        %v1239 = vpop.f32.mrf.mxu0
        %v1240 = vpop.f32.mrf.mxu0
        %v1241 = vpop.f32.mrf.mxu0
        %1242 = vdwg.mxu0
        %1243 = vrot.lane.b32.xlu0 %v899, 64
        %v1244 = vpop.permute.xlu0 %1243
        %v1246 = vsel %vm1097, %v1144, 0
        %v1249 = vsel %vm1151, %v1244, 0
        %1251 = vmatprep.subr.bf16.mxu0 0
        %1252 = vmatpush1.bf16.msra.mxu0 0
        %1253 = vmatprep.subr.bf16.mxu0 0
        %1254 = vmatpush1.bf16.msra.mxu0 0
        %1255 = vmatprep.subr.bf16.mxu0 0
        %1256 = vmatpush1.bf16.msra.mxu0 0
        %1257 = vmatprep.subr.bf16.mxu0 0
        %1258 = vmatpush1.bf16.msra.mxu0 0
        %1259 = vmatprep.subr.bf16.mxu0 0
        %1260 = vmatpush1.bf16.msra.mxu0 0
        %1261 = vmatprep.subr.bf16.mxu0 0
        %1262 = vmatpush1.bf16.msra.mxu0 0
        %1263 = vmatprep.subr.bf16.mxu0 0
        %1264 = vmatpush1.bf16.msra.mxu0 0
        %1265 = vmatprep.subr.bf16.mxu0 0
        %1266 = vmatpush1.bf16.msra.mxu0 %v1249
        %1267 = vmatprep.subr.bf16.mxu0 0
        %1268 = vmatpush2.bf16.msra.mxu0 0
        %1269 = vmatprep.subr.bf16.mxu0 0
        %1270 = vmatpush2.bf16.msra.mxu0 0
        %1271 = vmatprep.subr.bf16.mxu0 0
        %1272 = vmatpush2.bf16.msra.mxu0 0
        %1273 = vmatprep.subr.bf16.mxu0 0
        %1274 = vmatpush2.bf16.msra.mxu0 0
        %1275 = vmatprep.subr.bf16.mxu0 0
        %1276 = vmatpush2.bf16.msra.mxu0 0
        %1277 = vmatprep.subr.bf16.mxu0 0
        %1278 = vmatpush2.bf16.msra.mxu0 0
        %1279 = vmatprep.subr.bf16.mxu0 0
        %1280 = vmatpush2.bf16.msra.mxu0 0
        %1281 = vmatprep.subr.bf16.mxu0 0
        %1282 = vmatpush2.bf16.msra.mxu0 0
        %1283 = vmatprep.mubr.bf16.mxu0 0
        %1284 = vmatmul.mubr.bf16.gmra.mxu0 %v1246
        %v1285 = vpop.f32.mrf.mxu0
        %v1286 = vadd.f32 0.0, %v1285
        %v1287 = vpop.f32.mrf.mxu0
        %v1288 = vpop.f32.mrf.mxu0
        %v1289 = vpop.f32.mrf.mxu0
        %1290 = vdwg.mxu0
        %1291 = vrot.lane.b32.xlu0 %v900, 64
        %v1292 = vpop.permute.xlu0 %1291
        %v1294 = vsel %vm1097, %v1145, 0
        %v1297 = vsel %vm1151, %v1292, 0
        %1299 = vmatprep.subr.bf16.mxu0 0
        %1300 = vmatpush1.bf16.msra.mxu0 0
        %1301 = vmatprep.subr.bf16.mxu0 0
        %1302 = vmatpush1.bf16.msra.mxu0 0
        %1303 = vmatprep.subr.bf16.mxu0 0
        %1304 = vmatpush1.bf16.msra.mxu0 0
        %1305 = vmatprep.subr.bf16.mxu0 0
        %1306 = vmatpush1.bf16.msra.mxu0 0
        %1307 = vmatprep.subr.bf16.mxu0 0
        %1308 = vmatpush1.bf16.msra.mxu0 0
        %1309 = vmatprep.subr.bf16.mxu0 0
        %1310 = vmatpush1.bf16.msra.mxu0 0
        %1311 = vmatprep.subr.bf16.mxu0 0
        %1312 = vmatpush1.bf16.msra.mxu0 0
        %1313 = vmatprep.subr.bf16.mxu0 0
        %1314 = vmatpush1.bf16.msra.mxu0 %v1297
        %1315 = vmatprep.subr.bf16.mxu0 0
        %1316 = vmatpush2.bf16.msra.mxu0 0
        %1317 = vmatprep.subr.bf16.mxu0 0
        %1318 = vmatpush2.bf16.msra.mxu0 0
        %1319 = vmatprep.subr.bf16.mxu0 0
        %1320 = vmatpush2.bf16.msra.mxu0 0
        %1321 = vmatprep.subr.bf16.mxu0 0
        %1322 = vmatpush2.bf16.msra.mxu0 0
        %1323 = vmatprep.subr.bf16.mxu0 0
        %1324 = vmatpush2.bf16.msra.mxu0 0
        %1325 = vmatprep.subr.bf16.mxu0 0
        %1326 = vmatpush2.bf16.msra.mxu0 0
        %1327 = vmatprep.subr.bf16.mxu0 0
        %1328 = vmatpush2.bf16.msra.mxu0 0
        %1329 = vmatprep.subr.bf16.mxu0 0
        %1330 = vmatpush2.bf16.msra.mxu0 0
        %1331 = vmatprep.mubr.bf16.mxu0 0
        %1332 = vmatmul.mubr.bf16.gmra.mxu0 %v1294
        %v1333 = vpop.f32.mrf.mxu0
        %v1334 = vadd.f32 0.0, %v1333
        %v1335 = vpop.f32.mrf.mxu0
        %v1336 = vpop.f32.mrf.mxu0
        %v1337 = vpop.f32.mrf.mxu0
        %1338 = vdwg.mxu0
        %v1339 = vcombine.low %v1190, %v1286
        %v1340 = vcombine.high %v1190, %v1286
        %v1342 = vunpack.c.l.s4 1983009808
        %v1343 = vunpack.c.0.s8 %v1342
        %v1344 = vlaneseq
        %v1345 = vshrl.u32 %v1344, 7
        %v1346 = vsub.s32 %v1343, %v1345
        %v1347 = vrot.slane %v1339, %v1346
        %v1349 = vunpack.c.l.s4 1983009808
        %v1350 = vunpack.c.0.s8 %v1349
        %v1351 = vlaneseq
        %v1352 = vshrl.u32 %v1351, 7
        %v1353 = vsub.s32 %v1350, %v1352
        %v1354 = vrot.slane %v1340, %v1353
        %v1355 = vcombine.low %v1238, %v1334
        %v1356 = vcombine.high %v1238, %v1334
        %v1358 = vunpack.c.l.s4 1983009808
        %v1359 = vunpack.c.0.s8 %v1358
        %v1360 = vlaneseq
        %v1361 = vshrl.u32 %v1360, 7
        %v1362 = vsub.s32 %v1359, %v1361
        %v1363 = vrot.slane %v1355, %v1362
        %v1365 = vunpack.c.l.s4 1983009808
        %v1366 = vunpack.c.0.s8 %v1365
        %v1367 = vlaneseq
        %v1368 = vshrl.u32 %v1367, 7
        %v1369 = vsub.s32 %v1366, %v1368
        %v1370 = vrot.slane %v1356, %v1369
        %v1371 = vcombine.low %v1347, %v1363
        %v1372 = vcombine.high %v1347, %v1363
        %v1374 = vunpack.c.l.s4 1934713408
        %v1375 = vunpack.c.0.s8 %v1374
        %v1376 = vlaneseq
        %v1377 = vshrl.u32 %v1376, 7
        %v1378 = vsub.s32 %v1375, %v1377
        %v1379 = vrot.slane %v1371, %v1378
        %v1381 = vunpack.c.l.s4 1934713408
        %v1382 = vunpack.c.0.s8 %v1381
        %v1383 = vlaneseq
        %v1384 = vshrl.u32 %v1383, 7
        %v1385 = vsub.s32 %v1382, %v1384
        %v1386 = vrot.slane %v1372, %v1385
        %v1387 = vcombine.low %v1354, %v1370
        %v1388 = vcombine.high %v1354, %v1370
        %v1390 = vunpack.c.l.s4 1934713408
        %v1391 = vunpack.c.0.s8 %v1390
        %v1392 = vlaneseq
        %v1393 = vshrl.u32 %v1392, 7
        %v1394 = vsub.s32 %v1391, %v1393
        %v1395 = vrot.slane %v1387, %v1394
        %v1397 = vunpack.c.l.s4 1934713408
        %v1398 = vunpack.c.0.s8 %v1397
        %v1399 = vlaneseq
        %v1400 = vshrl.u32 %v1399, 7
        %v1401 = vsub.s32 %v1398, %v1400
        %v1402 = vrot.slane %v1388, %v1401
        %v1403 = vcombine.high %v1379, 0.0
        %v1404 = vcombine.high %v1386, 0.0
        %v1405 = vcombine.high %v1395, 0.0
        %v1406 = vcombine.high %v1402, 0.0
        %v1407 = vcombine.low %v1379, %v1386
        %v1409 = vunpack.c.l.s4 1983009808
        %v1410 = vunpack.c.0.s8 %v1409
        %v1411 = vlaneseq
        %v1412 = vshrl.u32 %v1411, 7
        %v1413 = vsub.s32 %v1410, %v1412
        %v1414 = vrot.slane %v1407, %v1413
        %v1415 = vcombine.low %v1403, %v1404
        %v1417 = vunpack.c.l.s4 1983009808
        %v1418 = vunpack.c.0.s8 %v1417
        %v1419 = vlaneseq
        %v1420 = vshrl.u32 %v1419, 7
        %v1421 = vsub.s32 %v1418, %v1420
        %v1422 = vrot.slane %v1415, %v1421
        %v1423 = vcombine.low %v1395, %v1402
        %v1425 = vunpack.c.l.s4 1983009808
        %v1426 = vunpack.c.0.s8 %v1425
        %v1427 = vlaneseq
        %v1428 = vshrl.u32 %v1427, 7
        %v1429 = vsub.s32 %v1426, %v1428
        %v1430 = vrot.slane %v1423, %v1429
        %v1431 = vcombine.low %v1405, %v1406
        %v1433 = vunpack.c.l.s4 1983009808
        %v1434 = vunpack.c.0.s8 %v1433
        %v1435 = vlaneseq
        %v1436 = vshrl.u32 %v1435, 7
        %v1437 = vsub.s32 %v1434, %v1436
        %v1438 = vrot.slane %v1431, %v1437
        %v1439 = vcombine.low %v1414, %v1422
        %v1440 = vcombine.high %v1414, %v1422
        %v1442 = vunpack.c.l.s4 1934713408
        %v1443 = vunpack.c.0.s8 %v1442
        %v1444 = vlaneseq
        %v1445 = vshrl.u32 %v1444, 7
        %v1446 = vsub.s32 %v1443, %v1445
        %v1447 = vrot.slane %v1439, %v1446
        %v1449 = vunpack.c.l.s4 1934713408
        %v1450 = vunpack.c.0.s8 %v1449
        %v1451 = vlaneseq
        %v1452 = vshrl.u32 %v1451, 7
        %v1453 = vsub.s32 %v1450, %v1452
        %v1454 = vrot.slane %v1440, %v1453
        %v1455 = vcombine.low %v1430, %v1438
        %v1456 = vcombine.high %v1430, %v1438
        %v1458 = vunpack.c.l.s4 1934713408
        %v1459 = vunpack.c.0.s8 %v1458
        %v1460 = vlaneseq
        %v1461 = vshrl.u32 %v1460, 7
        %v1462 = vsub.s32 %v1459, %v1461
        %v1463 = vrot.slane %v1455, %v1462
        %v1465 = vunpack.c.l.s4 1934713408
        %v1466 = vunpack.c.0.s8 %v1465
        %v1467 = vlaneseq
        %v1468 = vshrl.u32 %v1467, 7
        %v1469 = vsub.s32 %v1466, %v1468
        %v1470 = vrot.slane %v1456, %v1469
        %v1471 = vcombine.low %v1447, %v1463
        %v1472 = vcombine.high %v1447, %v1463
        %v1473 = vcombine.low %v1454, %v1470
        %v1474 = vcombine.high %v1454, %v1470
        %1476 = vrot.lane.b32.xlu0 %v1472, 32
        %v1477 = vpop.permute.xlu0 %1476
        %1480 = vrot.lane.b32.xlu0 %v1473, 64
        %v1481 = vpop.permute.xlu0 %1480
        %1484 = vrot.lane.b32.xlu0 %v1474, 96
        %v1485 = vpop.permute.xlu0 %1484
        %v1487 = vsel %vm739, %v1471, %v1477
        %v1488 = vsel %vm747, %v1487, %v1481
        %vm1489 = vcmask 785408
        %v1490 = vsel %vm1489, %v1488, %v1485
        %v1491 = vpack.c.bf16 %v1490, %v1490
        %v1492 = vld [vmem:[%s433] sm:$0xf]
        %v1493 = vld [vmem:[%s433 + $0x4] sm:$0xf]
        %v1494 = vld [vmem:[%s433 + $0x8] sm:$0xf]
        %v1495 = vld [vmem:[%s433 + $0xc] sm:$0xf]
        %v1496 = vld [vmem:[%s433 + $0x10] sm:$0xf]
        %v1497 = vld [vmem:[%s433 + $0x14] sm:$0xf]
        %v1498 = vld [vmem:[%s433 + $0x18] sm:$0xf]
        %v1499 = vld [vmem:[%s433 + $0x1c] sm:$0xf]
        %v1500 = vld [vmem:[%s433 + $0x20] sm:$0xf]
        %v1501 = vld [vmem:[%s433 + $0x24] sm:$0xf]
        %v1502 = vld [vmem:[%s433 + $0x28] sm:$0xf]
        %v1503 = vld [vmem:[%s433 + $0x2c] sm:$0xf]
        %v1504 = vld [vmem:[%s433 + $0x30] sm:$0xf]
        %v1505 = vld [vmem:[%s433 + $0x34] sm:$0xf]
        %v1506 = vld [vmem:[%s433 + $0x38] sm:$0xf]
        %v1507 = vld [vmem:[%s433 + $0x3c] sm:$0xf]
        %v1508 = vlaneseq
        %v1509 = vshrl.u32 %v1508, 7
        %v1510 = vsub.s32 1, %v1509
        %v1511 = vrot.slane %v444, %v1510
        %v1528 = vunpack.c.l.b16 %v1492
        %v1529 = vunpack.c.l.b16 %v1493
        %v1530 = vunpack.c.l.b16 %v1494
        %v1531 = vunpack.c.l.b16 %v1495
        %v1532 = vunpack.c.l.b16 %v1496
        %v1533 = vunpack.c.l.b16 %v1497
        %v1534 = vunpack.c.l.b16 %v1498
        %v1535 = vunpack.c.l.b16 %v1499
        %v1536 = vunpack.c.l.b16 %v1500
        %v1537 = vunpack.c.l.b16 %v1501
        %v1538 = vunpack.c.l.b16 %v1502
        %v1539 = vunpack.c.l.b16 %v1503
        %v1540 = vunpack.c.l.b16 %v1504
        %v1541 = vunpack.c.l.b16 %v1505
        %v1542 = vunpack.c.l.b16 %v1506
        %v1543 = vunpack.c.l.b16 %v1507
        %v1544 = vpack.c.b16 %v1529, %v1528
        %v1545 = vpack.c.b16 %v1531, %v1530
        %v1546 = vpack.c.b16 %v1533, %v1532
        %v1547 = vpack.c.b16 %v1535, %v1534
        %v1548 = vpack.c.b16 %v1537, %v1536
        %v1549 = vpack.c.b16 %v1539, %v1538
        %v1550 = vpack.c.b16 %v1541, %v1540
        %v1551 = vpack.c.b16 %v1543, %v1542
        %1560 = vmatprep.subr.bf16.mxu0 0
        %1561 = vmatpush1.bf16.msra.mxu0 %v1551
        %1562 = vmatprep.subr.bf16.mxu0 0
        %1563 = vmatpush1.bf16.msra.mxu0 %v1550
        %1564 = vmatprep.subr.bf16.mxu0 0
        %1565 = vmatpush1.bf16.msra.mxu0 %v1549
        %1566 = vmatprep.subr.bf16.mxu0 0
        %1567 = vmatpush1.bf16.msra.mxu0 %v1548
        %1568 = vmatprep.subr.bf16.mxu0 0
        %1569 = vmatpush1.bf16.msra.mxu0 %v1547
        %1570 = vmatprep.subr.bf16.mxu0 0
        %1571 = vmatpush1.bf16.msra.mxu0 %v1546
        %1572 = vmatprep.subr.bf16.mxu0 0
        %1573 = vmatpush1.bf16.msra.mxu0 %v1545
        %1574 = vmatprep.subr.bf16.mxu0 0
        %1575 = vmatpush1.bf16.msra.mxu0 %v1544
        %1576 = vmatprep.subr.bf16.mxu0 0
        %1577 = vmatpush2.bf16.msra.mxu0 0
        %1578 = vmatprep.subr.bf16.mxu0 0
        %1579 = vmatpush2.bf16.msra.mxu0 0
        %1580 = vmatprep.subr.bf16.mxu0 0
        %1581 = vmatpush2.bf16.msra.mxu0 0
        %1582 = vmatprep.subr.bf16.mxu0 0
        %1583 = vmatpush2.bf16.msra.mxu0 0
        %1584 = vmatprep.subr.bf16.mxu0 0
        %1585 = vmatpush2.bf16.msra.mxu0 0
        %1586 = vmatprep.subr.bf16.mxu0 0
        %1587 = vmatpush2.bf16.msra.mxu0 0
        %1588 = vmatprep.subr.bf16.mxu0 0
        %1589 = vmatpush2.bf16.msra.mxu0 0
        %1590 = vmatprep.subr.bf16.mxu0 0
        %1591 = vmatpush2.bf16.msra.mxu0 0
        %1592 = vmatprep.mubr.bf16.mxu0 0
        %1593 = vmatmul.mubr.bf16.gmra.mxu0 %v1491
        %v1594 = vpop.f32.mrf.mxu0
        %v1595 = vadd.f32 %v1511, %v1594
        %v1596 = vpop.f32.mrf.mxu0
        %v1597 = vpop.f32.mrf.mxu0
        %v1598 = vpop.f32.mrf.mxu0
        %1599 = vdwg.mxu0
        %v1600 = vunpack.c.l.bf16 %v479
        %v1601 = vadd.f32 %v1600, %v1595
        %1602 = vadd.xlane.f32.xlu0 %v1601
        %v1603 = vpop.xlane.xlu0 %1602
        %v1604 = vrcp.pop 128.0
        %v1605 = vmul.f32 %v1603, %v1604
        %v1606 = vsub.f32 %v1601, %v1605
        %v1607 = vmul.f32 %v1606, %v1606
        %1608 = vadd.xlane.f32.xlu0 %v1607
        %v1609 = vpop.xlane.xlu0 %1608
        %v1610 = vmul.f32 %v1609, %v1604
        %v1611 = vadd.f32 %v1610, 1e-05
        %v1612 = vrsqrt.pop %v1611
        %v1613 = vmul.f32 %v1606, %v1612
        %v1614 = vlaneseq
        %v1615 = vshrl.u32 %v1614, 7
        %v1616 = vsub.s32 2, %v1615
        %v1617 = vrot.slane %v444, %v1616
        %v1618 = vmul.f32 %v1613, %v1617
        %v1619 = vlaneseq
        %v1620 = vshrl.u32 %v1619, 7
        %v1621 = vsub.s32 3, %v1620
        %v1622 = vrot.slane %v444, %v1621
        %v1623 = vadd.f32 %v1618, %v1622
        %v1624 = vpack.c.bf16 %v1623, %v1623
        %v1625 = vld [vmem:[%s362] sm:$0xff]
        %v1626 = vld [vmem:[%s362 + $0x8] sm:$0xff]
        %v1627 = vld [vmem:[%s362 + $0x10] sm:$0xff]
        %v1628 = vld [vmem:[%s362 + $0x18] sm:$0xff]
        %v1629 = vld [vmem:[%s362 + $0x20] sm:$0xff]
        %v1630 = vld [vmem:[%s362 + $0x28] sm:$0xff]
        %v1631 = vld [vmem:[%s362 + $0x30] sm:$0xff]
        %v1632 = vld [vmem:[%s362 + $0x38] sm:$0xff]
        %v1633 = vld [vmem:[%s362 + $0x40] sm:$0xff]
        %v1634 = vld [vmem:[%s362 + $0x48] sm:$0xff]
        %v1635 = vld [vmem:[%s362 + $0x50] sm:$0xff]
        %v1636 = vld [vmem:[%s362 + $0x58] sm:$0xff]
        %v1637 = vld [vmem:[%s362 + $0x60] sm:$0xff]
        %v1638 = vld [vmem:[%s362 + $0x68] sm:$0xff]
        %v1639 = vld [vmem:[%s362 + $0x70] sm:$0xff]
        %v1640 = vld [vmem:[%s362 + $0x78] sm:$0xff]
        %v1641 = vld [vmem:[%s362 + $0x80] sm:$0xff]
        %v1642 = vld [vmem:[%s362 + $0x88] sm:$0xff]
        %v1643 = vld [vmem:[%s362 + $0x90] sm:$0xff]
        %v1644 = vld [vmem:[%s362 + $0x98] sm:$0xff]
        %v1645 = vld [vmem:[%s362 + $0xa0] sm:$0xff]
        %v1646 = vld [vmem:[%s362 + $0xa8] sm:$0xff]
        %v1647 = vld [vmem:[%s362 + $0xb0] sm:$0xff]
        %v1648 = vld [vmem:[%s362 + $0xb8] sm:$0xff]
        %v1649 = vld [vmem:[%s362 + $0xc0] sm:$0xff]
        %v1650 = vld [vmem:[%s362 + $0xc8] sm:$0xff]
        %v1651 = vld [vmem:[%s362 + $0xd0] sm:$0xff]
        %v1652 = vld [vmem:[%s362 + $0xd8] sm:$0xff]
        %v1653 = vld [vmem:[%s362 + $0xe0] sm:$0xff]
        %v1654 = vld [vmem:[%s362 + $0xe8] sm:$0xff]
        %v1655 = vld [vmem:[%s362 + $0xf0] sm:$0xff]
        %v1656 = vld [vmem:[%s362 + $0xf8] sm:$0xff]
        %v1657 = vlaneseq
        %v1658 = vshrl.u32 %v1657, 7
        %v1659 = vsub.s32 4, %v1658
        %v1660 = vrot.slane %v444, %v1659
        %v1661 = vlaneseq
        %v1662 = vshrl.u32 %v1661, 7
        %v1663 = vsub.s32 4, %v1662
        %v1664 = vrot.slane %v445, %v1663
        %v1665 = vlaneseq
        %v1666 = vshrl.u32 %v1665, 7
        %v1667 = vsub.s32 4, %v1666
        %v1668 = vrot.slane %v446, %v1667
        %v1669 = vlaneseq
        %v1670 = vshrl.u32 %v1669, 7
        %v1671 = vsub.s32 4, %v1670
        %v1672 = vrot.slane %v447, %v1671
        %v1705 = vunpack.c.l.b16 %v1625
        %v1706 = vunpack.c.h.b16 %v1625
        %v1707 = vunpack.c.l.b16 %v1626
        %v1708 = vunpack.c.h.b16 %v1626
        %v1709 = vunpack.c.l.b16 %v1627
        %v1710 = vunpack.c.h.b16 %v1627
        %v1711 = vunpack.c.l.b16 %v1628
        %v1712 = vunpack.c.h.b16 %v1628
        %v1713 = vunpack.c.l.b16 %v1629
        %v1714 = vunpack.c.h.b16 %v1629
        %v1715 = vunpack.c.l.b16 %v1630
        %v1716 = vunpack.c.h.b16 %v1630
        %v1717 = vunpack.c.l.b16 %v1631
        %v1718 = vunpack.c.h.b16 %v1631
        %v1719 = vunpack.c.l.b16 %v1632
        %v1720 = vunpack.c.h.b16 %v1632
        %v1721 = vunpack.c.l.b16 %v1633
        %v1722 = vunpack.c.h.b16 %v1633
        %v1723 = vunpack.c.l.b16 %v1634
        %v1724 = vunpack.c.h.b16 %v1634
        %v1725 = vunpack.c.l.b16 %v1635
        %v1726 = vunpack.c.h.b16 %v1635
        %v1727 = vunpack.c.l.b16 %v1636
        %v1728 = vunpack.c.h.b16 %v1636
        %v1729 = vunpack.c.l.b16 %v1637
        %v1730 = vunpack.c.h.b16 %v1637
        %v1731 = vunpack.c.l.b16 %v1638
        %v1732 = vunpack.c.h.b16 %v1638
        %v1733 = vunpack.c.l.b16 %v1639
        %v1734 = vunpack.c.h.b16 %v1639
        %v1735 = vunpack.c.l.b16 %v1640
        %v1736 = vunpack.c.h.b16 %v1640
        %v1737 = vunpack.c.l.b16 %v1641
        %v1738 = vunpack.c.h.b16 %v1641
        %v1739 = vunpack.c.l.b16 %v1642
        %v1740 = vunpack.c.h.b16 %v1642
        %v1741 = vunpack.c.l.b16 %v1643
        %v1742 = vunpack.c.h.b16 %v1643
        %v1743 = vunpack.c.l.b16 %v1644
        %v1744 = vunpack.c.h.b16 %v1644
        %v1745 = vunpack.c.l.b16 %v1645
        %v1746 = vunpack.c.h.b16 %v1645
        %v1747 = vunpack.c.l.b16 %v1646
        %v1748 = vunpack.c.h.b16 %v1646
        %v1749 = vunpack.c.l.b16 %v1647
        %v1750 = vunpack.c.h.b16 %v1647
        %v1751 = vunpack.c.l.b16 %v1648
        %v1752 = vunpack.c.h.b16 %v1648
        %v1753 = vunpack.c.l.b16 %v1649
        %v1754 = vunpack.c.h.b16 %v1649
        %v1755 = vunpack.c.l.b16 %v1650
        %v1756 = vunpack.c.h.b16 %v1650
        %v1757 = vunpack.c.l.b16 %v1651
        %v1758 = vunpack.c.h.b16 %v1651
        %v1759 = vunpack.c.l.b16 %v1652
        %v1760 = vunpack.c.h.b16 %v1652
        %v1761 = vunpack.c.l.b16 %v1653
        %v1762 = vunpack.c.h.b16 %v1653
        %v1763 = vunpack.c.l.b16 %v1654
        %v1764 = vunpack.c.h.b16 %v1654
        %v1765 = vunpack.c.l.b16 %v1655
        %v1766 = vunpack.c.h.b16 %v1655
        %v1767 = vunpack.c.l.b16 %v1656
        %v1768 = vunpack.c.h.b16 %v1656
        %v1769 = vpack.c.b16 %v1709, %v1705
        %v1770 = vpack.c.b16 %v1710, %v1706
        %v1771 = vpack.c.b16 %v1711, %v1707
        %v1772 = vpack.c.b16 %v1712, %v1708
        %v1773 = vpack.c.b16 %v1717, %v1713
        %v1774 = vpack.c.b16 %v1718, %v1714
        %v1775 = vpack.c.b16 %v1719, %v1715
        %v1776 = vpack.c.b16 %v1720, %v1716
        %v1777 = vpack.c.b16 %v1725, %v1721
        %v1778 = vpack.c.b16 %v1726, %v1722
        %v1779 = vpack.c.b16 %v1727, %v1723
        %v1780 = vpack.c.b16 %v1728, %v1724
        %v1781 = vpack.c.b16 %v1733, %v1729
        %v1782 = vpack.c.b16 %v1734, %v1730
        %v1783 = vpack.c.b16 %v1735, %v1731
        %v1784 = vpack.c.b16 %v1736, %v1732
        %v1785 = vpack.c.b16 %v1741, %v1737
        %v1786 = vpack.c.b16 %v1742, %v1738
        %v1787 = vpack.c.b16 %v1743, %v1739
        %v1788 = vpack.c.b16 %v1744, %v1740
        %v1789 = vpack.c.b16 %v1749, %v1745
        %v1790 = vpack.c.b16 %v1750, %v1746
        %v1791 = vpack.c.b16 %v1751, %v1747
        %v1792 = vpack.c.b16 %v1752, %v1748
        %v1793 = vpack.c.b16 %v1757, %v1753
        %v1794 = vpack.c.b16 %v1758, %v1754
        %v1795 = vpack.c.b16 %v1759, %v1755
        %v1796 = vpack.c.b16 %v1760, %v1756
        %v1797 = vpack.c.b16 %v1765, %v1761
        %v1798 = vpack.c.b16 %v1766, %v1762
        %v1799 = vpack.c.b16 %v1767, %v1763
        %v1800 = vpack.c.b16 %v1768, %v1764
        %1833 = vmatprep.subr.bf16.mxu0 %v1798
        %1834 = vmatpush1.bf16.msra.mxu0 %v1797
        %1835 = vmatprep.subr.bf16.mxu0 %v1794
        %1836 = vmatpush1.bf16.msra.mxu0 %v1793
        %1837 = vmatprep.subr.bf16.mxu0 %v1790
        %1838 = vmatpush1.bf16.msra.mxu0 %v1789
        %1839 = vmatprep.subr.bf16.mxu0 %v1786
        %1840 = vmatpush1.bf16.msra.mxu0 %v1785
        %1841 = vmatprep.subr.bf16.mxu0 %v1782
        %1842 = vmatpush1.bf16.msra.mxu0 %v1781
        %1843 = vmatprep.subr.bf16.mxu0 %v1778
        %1844 = vmatpush1.bf16.msra.mxu0 %v1777
        %1845 = vmatprep.subr.bf16.mxu0 %v1774
        %1846 = vmatpush1.bf16.msra.mxu0 %v1773
        %1847 = vmatprep.subr.bf16.mxu0 %v1770
        %1848 = vmatpush1.bf16.msra.mxu0 %v1769
        %1849 = vmatprep.subr.bf16.mxu0 0
        %1850 = vmatpush2.bf16.msra.mxu0 0
        %1851 = vmatprep.subr.bf16.mxu0 0
        %1852 = vmatpush2.bf16.msra.mxu0 0
        %1853 = vmatprep.subr.bf16.mxu0 0
        %1854 = vmatpush2.bf16.msra.mxu0 0
        %1855 = vmatprep.subr.bf16.mxu0 0
        %1856 = vmatpush2.bf16.msra.mxu0 0
        %1857 = vmatprep.subr.bf16.mxu0 0
        %1858 = vmatpush2.bf16.msra.mxu0 0
        %1859 = vmatprep.subr.bf16.mxu0 0
        %1860 = vmatpush2.bf16.msra.mxu0 0
        %1861 = vmatprep.subr.bf16.mxu0 0
        %1862 = vmatpush2.bf16.msra.mxu0 0
        %1863 = vmatprep.subr.bf16.mxu0 0
        %1864 = vmatpush2.bf16.msra.mxu0 0
        %1865 = vmatprep.mubr.bf16.mxu0 0
        %1866 = vmatmul.mubr.bf16.gmra.mxu0 %v1624
        %v1867 = vpop.f32.mrf.mxu0
        %v1868 = vadd.f32 %v1660, %v1867
        %v1869 = vpop.f32.mrf.mxu0
        %v1870 = vadd.f32 %v1664, %v1869
        %v1871 = vpop.f32.mrf.mxu0
        %v1872 = vpop.f32.mrf.mxu0
        %1873 = vdwg.mxu0
        %1874 = vmatprep.subr.bf16.mxu0 %v1800
        %1875 = vmatpush1.bf16.msra.mxu0 %v1799
        %1876 = vmatprep.subr.bf16.mxu0 %v1796
        %1877 = vmatpush1.bf16.msra.mxu0 %v1795
        %1878 = vmatprep.subr.bf16.mxu0 %v1792
        %1879 = vmatpush1.bf16.msra.mxu0 %v1791
        %1880 = vmatprep.subr.bf16.mxu0 %v1788
        %1881 = vmatpush1.bf16.msra.mxu0 %v1787
        %1882 = vmatprep.subr.bf16.mxu0 %v1784
        %1883 = vmatpush1.bf16.msra.mxu0 %v1783
        %1884 = vmatprep.subr.bf16.mxu0 %v1780
        %1885 = vmatpush1.bf16.msra.mxu0 %v1779
        %1886 = vmatprep.subr.bf16.mxu0 %v1776
        %1887 = vmatpush1.bf16.msra.mxu0 %v1775
        %1888 = vmatprep.subr.bf16.mxu0 %v1772
        %1889 = vmatpush1.bf16.msra.mxu0 %v1771
        %1890 = vmatprep.subr.bf16.mxu0 0
        %1891 = vmatpush2.bf16.msra.mxu0 0
        %1892 = vmatprep.subr.bf16.mxu0 0
        %1893 = vmatpush2.bf16.msra.mxu0 0
        %1894 = vmatprep.subr.bf16.mxu0 0
        %1895 = vmatpush2.bf16.msra.mxu0 0
        %1896 = vmatprep.subr.bf16.mxu0 0
        %1897 = vmatpush2.bf16.msra.mxu0 0
        %1898 = vmatprep.subr.bf16.mxu0 0
        %1899 = vmatpush2.bf16.msra.mxu0 0
        %1900 = vmatprep.subr.bf16.mxu0 0
        %1901 = vmatpush2.bf16.msra.mxu0 0
        %1902 = vmatprep.subr.bf16.mxu0 0
        %1903 = vmatpush2.bf16.msra.mxu0 0
        %1904 = vmatprep.subr.bf16.mxu0 0
        %1905 = vmatpush2.bf16.msra.mxu0 0
        %1906 = vmatprep.mubr.bf16.mxu0 0
        %1907 = vmatmul.mubr.bf16.gmra.mxu0 %v1624
        %v1908 = vpop.f32.mrf.mxu0
        %v1909 = vadd.f32 %v1668, %v1908
        %v1910 = vpop.f32.mrf.mxu0
        %v1911 = vadd.f32 %v1672, %v1910
        %v1912 = vpop.f32.mrf.mxu0
        %v1913 = vpop.f32.mrf.mxu0
        %1914 = vdwg.mxu0
        %v1915 = vmul.f32 %v1868, 0.5
        %v1916 = vmul.f32 %v1870, 0.5
        %v1917 = vmul.f32 %v1909, 0.5
        %v1918 = vmul.f32 %v1911, 0.5
        %v1919 = vmul.f32 %v1868, 0.044715
        %v1920 = vmul.f32 %v1870, 0.044715
        %v1921 = vmul.f32 %v1909, 0.044715
        %v1922 = vmul.f32 %v1911, 0.044715
        %v1923 = vmul.f32 %v1919, %v1868
        %v1924 = vmul.f32 %v1920, %v1870
        %v1925 = vmul.f32 %v1921, %v1909
        %v1926 = vmul.f32 %v1922, %v1911
        %v1927 = vmul.f32 %v1923, %v1868
        %v1928 = vmul.f32 %v1924, %v1870
        %v1929 = vmul.f32 %v1925, %v1909
        %v1930 = vmul.f32 %v1926, %v1911
        %v1931 = vadd.f32 %v1868, %v1927
        %v1932 = vadd.f32 %v1870, %v1928
        %v1933 = vadd.f32 %v1909, %v1929
        %v1934 = vadd.f32 %v1911, %v1930
        %v1935 = vmul.f32 %v1931, 0.7978846
        %v1936 = vmul.f32 %v1932, 0.7978846
        %v1937 = vmul.f32 %v1933, 0.7978846
        %v1938 = vmul.f32 %v1934, 0.7978846
        %v1939 = vtanh.pop %v1935
        %v1940 = vtanh.pop %v1936
        %v1941 = vtanh.pop %v1937
        %v1942 = vtanh.pop %v1938
        %v1943 = vadd.f32 %v1939, 1.0
        %v1944 = vadd.f32 %v1940, 1.0
        %v1945 = vadd.f32 %v1941, 1.0
        %v1946 = vadd.f32 %v1942, 1.0
        %v1947 = vmul.f32 %v1915, %v1943
        %v1948 = vmul.f32 %v1916, %v1944
        %v1949 = vmul.f32 %v1917, %v1945
        %v1950 = vmul.f32 %v1918, %v1946
        %v1951 = vpack.c.bf16 %v1947, %v1947
        %v1952 = vpack.c.bf16 %v1948, %v1948
        %v1953 = vpack.c.bf16 %v1949, %v1949
        %v1954 = vpack.c.bf16 %v1950, %v1950
        %v1955 = vld [vmem:[%s371] sm:$0xf]
        %v1956 = vld [vmem:[%s371 + $0x4] sm:$0xf]
        %v1957 = vld [vmem:[%s371 + $0x8] sm:$0xf]
        %v1958 = vld [vmem:[%s371 + $0xc] sm:$0xf]
        %v1959 = vld [vmem:[%s371 + $0x10] sm:$0xf]
        %v1960 = vld [vmem:[%s371 + $0x14] sm:$0xf]
        %v1961 = vld [vmem:[%s371 + $0x18] sm:$0xf]
        %v1962 = vld [vmem:[%s371 + $0x1c] sm:$0xf]
        %v1963 = vld [vmem:[%s371 + $0x20] sm:$0xf]
        %v1964 = vld [vmem:[%s371 + $0x24] sm:$0xf]
        %v1965 = vld [vmem:[%s371 + $0x28] sm:$0xf]
        %v1966 = vld [vmem:[%s371 + $0x2c] sm:$0xf]
        %v1967 = vld [vmem:[%s371 + $0x30] sm:$0xf]
        %v1968 = vld [vmem:[%s371 + $0x34] sm:$0xf]
        %v1969 = vld [vmem:[%s371 + $0x38] sm:$0xf]
        %v1970 = vld [vmem:[%s371 + $0x3c] sm:$0xf]
        %v1971 = vld [vmem:[%s371 + $0x40] sm:$0xf]
        %v1972 = vld [vmem:[%s371 + $0x44] sm:$0xf]
        %v1973 = vld [vmem:[%s371 + $0x48] sm:$0xf]
        %v1974 = vld [vmem:[%s371 + $0x4c] sm:$0xf]
        %v1975 = vld [vmem:[%s371 + $0x50] sm:$0xf]
        %v1976 = vld [vmem:[%s371 + $0x54] sm:$0xf]
        %v1977 = vld [vmem:[%s371 + $0x58] sm:$0xf]
        %v1978 = vld [vmem:[%s371 + $0x5c] sm:$0xf]
        %v1979 = vld [vmem:[%s371 + $0x60] sm:$0xf]
        %v1980 = vld [vmem:[%s371 + $0x64] sm:$0xf]
        %v1981 = vld [vmem:[%s371 + $0x68] sm:$0xf]
        %v1982 = vld [vmem:[%s371 + $0x6c] sm:$0xf]
        %v1983 = vld [vmem:[%s371 + $0x70] sm:$0xf]
        %v1984 = vld [vmem:[%s371 + $0x74] sm:$0xf]
        %v1985 = vld [vmem:[%s371 + $0x78] sm:$0xf]
        %v1986 = vld [vmem:[%s371 + $0x7c] sm:$0xf]
        %v1987 = vld [vmem:[%s371 + $0x80] sm:$0xf]
        %v1988 = vld [vmem:[%s371 + $0x84] sm:$0xf]
        %v1989 = vld [vmem:[%s371 + $0x88] sm:$0xf]
        %v1990 = vld [vmem:[%s371 + $0x8c] sm:$0xf]
        %v1991 = vld [vmem:[%s371 + $0x90] sm:$0xf]
        %v1992 = vld [vmem:[%s371 + $0x94] sm:$0xf]
        %v1993 = vld [vmem:[%s371 + $0x98] sm:$0xf]
        %v1994 = vld [vmem:[%s371 + $0x9c] sm:$0xf]
        %v1995 = vld [vmem:[%s371 + $0xa0] sm:$0xf]
        %v1996 = vld [vmem:[%s371 + $0xa4] sm:$0xf]
        %v1997 = vld [vmem:[%s371 + $0xa8] sm:$0xf]
        %v1998 = vld [vmem:[%s371 + $0xac] sm:$0xf]
        %v1999 = vld [vmem:[%s371 + $0xb0] sm:$0xf]
        %v2000 = vld [vmem:[%s371 + $0xb4] sm:$0xf]
        %v2001 = vld [vmem:[%s371 + $0xb8] sm:$0xf]
        %v2002 = vld [vmem:[%s371 + $0xbc] sm:$0xf]
        %v2003 = vld [vmem:[%s371 + $0xc0] sm:$0xf]
        %v2004 = vld [vmem:[%s371 + $0xc4] sm:$0xf]
        %v2005 = vld [vmem:[%s371 + $0xc8] sm:$0xf]
        %v2006 = vld [vmem:[%s371 + $0xcc] sm:$0xf]
        %v2007 = vld [vmem:[%s371 + $0xd0] sm:$0xf]
        %v2008 = vld [vmem:[%s371 + $0xd4] sm:$0xf]
        %v2009 = vld [vmem:[%s371 + $0xd8] sm:$0xf]
        %v2010 = vld [vmem:[%s371 + $0xdc] sm:$0xf]
        %v2011 = vld [vmem:[%s371 + $0xe0] sm:$0xf]
        %v2012 = vld [vmem:[%s371 + $0xe4] sm:$0xf]
        %v2013 = vld [vmem:[%s371 + $0xe8] sm:$0xf]
        %v2014 = vld [vmem:[%s371 + $0xec] sm:$0xf]
        %v2015 = vld [vmem:[%s371 + $0xf0] sm:$0xf]
        %v2016 = vld [vmem:[%s371 + $0xf4] sm:$0xf]
        %v2017 = vld [vmem:[%s371 + $0xf8] sm:$0xf]
        %v2018 = vld [vmem:[%s371 + $0xfc] sm:$0xf]
        %v2019 = vlaneseq
        %v2020 = vshrl.u32 %v2019, 7
        %v2021 = vsub.s32 5, %v2020
        %v2022 = vrot.slane %v444, %v2021
        %v2087 = vunpack.c.l.b16 %v1955
        %v2088 = vunpack.c.l.b16 %v1956
        %v2089 = vunpack.c.l.b16 %v1957
        %v2090 = vunpack.c.l.b16 %v1958
        %v2091 = vunpack.c.l.b16 %v1959
        %v2092 = vunpack.c.l.b16 %v1960
        %v2093 = vunpack.c.l.b16 %v1961
        %v2094 = vunpack.c.l.b16 %v1962
        %v2095 = vunpack.c.l.b16 %v1963
        %v2096 = vunpack.c.l.b16 %v1964
        %v2097 = vunpack.c.l.b16 %v1965
        %v2098 = vunpack.c.l.b16 %v1966
        %v2099 = vunpack.c.l.b16 %v1967
        %v2100 = vunpack.c.l.b16 %v1968
        %v2101 = vunpack.c.l.b16 %v1969
        %v2102 = vunpack.c.l.b16 %v1970
        %v2103 = vunpack.c.l.b16 %v1971
        %v2104 = vunpack.c.l.b16 %v1972
        %v2105 = vunpack.c.l.b16 %v1973
        %v2106 = vunpack.c.l.b16 %v1974
        %v2107 = vunpack.c.l.b16 %v1975
        %v2108 = vunpack.c.l.b16 %v1976
        %v2109 = vunpack.c.l.b16 %v1977
        %v2110 = vunpack.c.l.b16 %v1978
        %v2111 = vunpack.c.l.b16 %v1979
        %v2112 = vunpack.c.l.b16 %v1980
        %v2113 = vunpack.c.l.b16 %v1981
        %v2114 = vunpack.c.l.b16 %v1982
        %v2115 = vunpack.c.l.b16 %v1983
        %v2116 = vunpack.c.l.b16 %v1984
        %v2117 = vunpack.c.l.b16 %v1985
        %v2118 = vunpack.c.l.b16 %v1986
        %v2119 = vunpack.c.l.b16 %v1987
        %v2120 = vunpack.c.l.b16 %v1988
        %v2121 = vunpack.c.l.b16 %v1989
        %v2122 = vunpack.c.l.b16 %v1990
        %v2123 = vunpack.c.l.b16 %v1991
        %v2124 = vunpack.c.l.b16 %v1992
        %v2125 = vunpack.c.l.b16 %v1993
        %v2126 = vunpack.c.l.b16 %v1994
        %v2127 = vunpack.c.l.b16 %v1995
        %v2128 = vunpack.c.l.b16 %v1996
        %v2129 = vunpack.c.l.b16 %v1997
        %v2130 = vunpack.c.l.b16 %v1998
        %v2131 = vunpack.c.l.b16 %v1999
        %v2132 = vunpack.c.l.b16 %v2000
        %v2133 = vunpack.c.l.b16 %v2001
        %v2134 = vunpack.c.l.b16 %v2002
        %v2135 = vunpack.c.l.b16 %v2003
        %v2136 = vunpack.c.l.b16 %v2004
        %v2137 = vunpack.c.l.b16 %v2005
        %v2138 = vunpack.c.l.b16 %v2006
        %v2139 = vunpack.c.l.b16 %v2007
        %v2140 = vunpack.c.l.b16 %v2008
        %v2141 = vunpack.c.l.b16 %v2009
        %v2142 = vunpack.c.l.b16 %v2010
        %v2143 = vunpack.c.l.b16 %v2011
        %v2144 = vunpack.c.l.b16 %v2012
        %v2145 = vunpack.c.l.b16 %v2013
        %v2146 = vunpack.c.l.b16 %v2014
        %v2147 = vunpack.c.l.b16 %v2015
        %v2148 = vunpack.c.l.b16 %v2016
        %v2149 = vunpack.c.l.b16 %v2017
        %v2150 = vunpack.c.l.b16 %v2018
        %v2151 = vpack.c.b16 %v2088, %v2087
        %v2152 = vpack.c.b16 %v2090, %v2089
        %v2153 = vpack.c.b16 %v2092, %v2091
        %v2154 = vpack.c.b16 %v2094, %v2093
        %v2155 = vpack.c.b16 %v2096, %v2095
        %v2156 = vpack.c.b16 %v2098, %v2097
        %v2157 = vpack.c.b16 %v2100, %v2099
        %v2158 = vpack.c.b16 %v2102, %v2101
        %v2159 = vpack.c.b16 %v2104, %v2103
        %v2160 = vpack.c.b16 %v2106, %v2105
        %v2161 = vpack.c.b16 %v2108, %v2107
        %v2162 = vpack.c.b16 %v2110, %v2109
        %v2163 = vpack.c.b16 %v2112, %v2111
        %v2164 = vpack.c.b16 %v2114, %v2113
        %v2165 = vpack.c.b16 %v2116, %v2115
        %v2166 = vpack.c.b16 %v2118, %v2117
        %v2167 = vpack.c.b16 %v2120, %v2119
        %v2168 = vpack.c.b16 %v2122, %v2121
        %v2169 = vpack.c.b16 %v2124, %v2123
        %v2170 = vpack.c.b16 %v2126, %v2125
        %v2171 = vpack.c.b16 %v2128, %v2127
        %v2172 = vpack.c.b16 %v2130, %v2129
        %v2173 = vpack.c.b16 %v2132, %v2131
        %v2174 = vpack.c.b16 %v2134, %v2133
        %v2175 = vpack.c.b16 %v2136, %v2135
        %v2176 = vpack.c.b16 %v2138, %v2137
        %v2177 = vpack.c.b16 %v2140, %v2139
        %v2178 = vpack.c.b16 %v2142, %v2141
        %v2179 = vpack.c.b16 %v2144, %v2143
        %v2180 = vpack.c.b16 %v2146, %v2145
        %v2181 = vpack.c.b16 %v2148, %v2147
        %v2182 = vpack.c.b16 %v2150, %v2149
        %2215 = vmatprep.subr.bf16.mxu0 0
        %2216 = vmatpush1.bf16.msra.mxu0 %v2158
        %2217 = vmatprep.subr.bf16.mxu0 0
        %2218 = vmatpush1.bf16.msra.mxu0 %v2157
        %2219 = vmatprep.subr.bf16.mxu0 0
        %2220 = vmatpush1.bf16.msra.mxu0 %v2156
        %2221 = vmatprep.subr.bf16.mxu0 0
        %2222 = vmatpush1.bf16.msra.mxu0 %v2155
        %2223 = vmatprep.subr.bf16.mxu0 0
        %2224 = vmatpush1.bf16.msra.mxu0 %v2154
        %2225 = vmatprep.subr.bf16.mxu0 0
        %2226 = vmatpush1.bf16.msra.mxu0 %v2153
        %2227 = vmatprep.subr.bf16.mxu0 0
        %2228 = vmatpush1.bf16.msra.mxu0 %v2152
        %2229 = vmatprep.subr.bf16.mxu0 0
        %2230 = vmatpush1.bf16.msra.mxu0 %v2151
        %2231 = vmatprep.subr.bf16.mxu0 0
        %2232 = vmatpush2.bf16.msra.mxu0 %v2166
        %2233 = vmatprep.subr.bf16.mxu0 0
        %2234 = vmatpush2.bf16.msra.mxu0 %v2165
        %2235 = vmatprep.subr.bf16.mxu0 0
        %2236 = vmatpush2.bf16.msra.mxu0 %v2164
        %2237 = vmatprep.subr.bf16.mxu0 0
        %2238 = vmatpush2.bf16.msra.mxu0 %v2163
        %2239 = vmatprep.subr.bf16.mxu0 0
        %2240 = vmatpush2.bf16.msra.mxu0 %v2162
        %2241 = vmatprep.subr.bf16.mxu0 0
        %2242 = vmatpush2.bf16.msra.mxu0 %v2161
        %2243 = vmatprep.subr.bf16.mxu0 0
        %2244 = vmatpush2.bf16.msra.mxu0 %v2160
        %2245 = vmatprep.subr.bf16.mxu0 0
        %2246 = vmatpush2.bf16.msra.mxu0 %v2159
        %2247 = vmatprep.mubr.bf16.mxu0 %v1952
        %2248 = vmatmul.mubr.bf16.gmra.mxu0 %v1951
        %v2249 = vpop.f32.mrf.mxu0
        %v2250 = vadd.f32 %v2022, %v2249
        %v2251 = vpop.f32.mrf.mxu0
        %v2252 = vpop.f32.mrf.mxu0
        %v2253 = vpop.f32.mrf.mxu0
        %2254 = vdwg.mxu0
        %2255 = vmatprep.subr.bf16.mxu0 0
        %2256 = vmatpush1.bf16.msra.mxu0 %v2174
        %2257 = vmatprep.subr.bf16.mxu0 0
        %2258 = vmatpush1.bf16.msra.mxu0 %v2173
        %2259 = vmatprep.subr.bf16.mxu0 0
        %2260 = vmatpush1.bf16.msra.mxu0 %v2172
        %2261 = vmatprep.subr.bf16.mxu0 0
        %2262 = vmatpush1.bf16.msra.mxu0 %v2171
        %2263 = vmatprep.subr.bf16.mxu0 0
        %2264 = vmatpush1.bf16.msra.mxu0 %v2170
        %2265 = vmatprep.subr.bf16.mxu0 0
        %2266 = vmatpush1.bf16.msra.mxu0 %v2169
        %2267 = vmatprep.subr.bf16.mxu0 0
        %2268 = vmatpush1.bf16.msra.mxu0 %v2168
        %2269 = vmatprep.subr.bf16.mxu0 0
        %2270 = vmatpush1.bf16.msra.mxu0 %v2167
        %2271 = vmatprep.subr.bf16.mxu0 0
        %2272 = vmatpush2.bf16.msra.mxu0 %v2182
        %2273 = vmatprep.subr.bf16.mxu0 0
        %2274 = vmatpush2.bf16.msra.mxu0 %v2181
        %2275 = vmatprep.subr.bf16.mxu0 0
        %2276 = vmatpush2.bf16.msra.mxu0 %v2180
        %2277 = vmatprep.subr.bf16.mxu0 0
        %2278 = vmatpush2.bf16.msra.mxu0 %v2179
        %2279 = vmatprep.subr.bf16.mxu0 0
        %2280 = vmatpush2.bf16.msra.mxu0 %v2178
        %2281 = vmatprep.subr.bf16.mxu0 0
        %2282 = vmatpush2.bf16.msra.mxu0 %v2177
        %2283 = vmatprep.subr.bf16.mxu0 0
        %2284 = vmatpush2.bf16.msra.mxu0 %v2176
        %2285 = vmatprep.subr.bf16.mxu0 0
        %2286 = vmatpush2.bf16.msra.mxu0 %v2175
        %2287 = vmatprep.mubr.bf16.mxu0 %v1954
        %2288 = vmatmul.mubr.bf16.gmra.mxu0 %v1953
        %v2289 = vpop.f32.mrf.mxu0
        %v2290 = vadd.f32 %v2250, %v2289
        %v2291 = vpop.f32.mrf.mxu0
        %v2292 = vpop.f32.mrf.mxu0
        %v2293 = vpop.f32.mrf.mxu0
        %2294 = vdwg.mxu0
        %v2295 = vadd.f32 %v1623, %v2290
        %2296 = vadd.xlane.f32.xlu0 %v2295
        %v2297 = vpop.xlane.xlu0 %2296
        %v2298 = vmul.f32 %v2297, %v1604
        %v2299 = vsub.f32 %v2295, %v2298
        %v2300 = vmul.f32 %v2299, %v2299
        %2301 = vadd.xlane.f32.xlu0 %v2300
        %v2302 = vpop.xlane.xlu0 %2301
        %v2303 = vmul.f32 %v2302, %v1604
        %v2304 = vadd.f32 %v2303, 1e-05
        %v2305 = vrsqrt.pop %v2304
        %v2306 = vmul.f32 %v2299, %v2305
        %v2307 = vlaneseq
        %v2308 = vshrl.u32 %v2307, 7
        %v2309 = vsub.s32 6, %v2308
        %v2310 = vrot.slane %v444, %v2309
        %v2311 = vmul.f32 %v2306, %v2310
        %v2312 = vlaneseq
        %v2313 = vshrl.u32 %v2312, 7
        %v2314 = vsub.s32 7, %v2313
        %v2315 = vrot.slane %v444, %v2314
        %v2316 = vadd.f32 %v2311, %v2315
        %v2317 = vpack.c.bf16 %v2316, %v2316
        %2318 = vst [vmem:[#allocation2] sm:$0xf] %v2317
        %p2319 = scmp.eq.s32.totalorder %s29, 1
        // Predicated region
        $region65: #{rd_model_forward.2} parent=47 // pred_check
          %p2320 = pneg %p2319
        $region66: #{rd_model_forward.2} parent=47 // pred_check_branch
          %2322 = sbr.rel (%p2320) target = $region68
        $region67: #{rd_model_forward.2} parent=47 // pred_region
          %2323 = vst [vmem:[%s442] sm:$0xff] %v2316
        $region68: #{rd_model_forward.2} parent=47 // pred_fallthru
          _
        %p2324 = scmp.lt.s32.totalorder %s28, 1
        %s2325 = scalar_select %p2324, %s28, 1
        %s2326 = smul.addr %s2325, 8
        %s2327 = scalar_lea.vmem %s7, %s2326
        // Predicated region
        $region69: #{rd_model_forward.2} parent=47 // pred_check
          %p2328 = pneg %p231
        $region70: #{rd_model_forward.2} parent=47 // pred_check_branch
          %2330 = sbr.rel (%p2328) target = $region72
        $region71: #{rd_model_forward.2} parent=47 // pred_region
          _
        $region72: #{rd_model_forward.2} parent=47 // pred_fallthru
          _
      $region48: #{rd_model_forward.2} parent=5 // pred_fallthru
        _
      %p2331 = scmp.le.s32.totalorder 2, %s19
      // Predicated region
      $region73: #{rd_model_forward.2} parent=5 // pred_check
        %p2332 = pneg %p2331
      $region74: #{rd_model_forward.2} parent=5 // pred_check_branch
        %2334 = sbr.rel (%p2332) target = $region76
      $region75: #{rd_model_forward.2} parent=5 // pred_region
        %s2335 = ssub.s32 %s19, 2
        // Predicated region
        $region77: #{rd_model_forward.2} parent=75 // pred_check
          %p2336 = pneg %p237
        $region78: #{rd_model_forward.2} parent=75 // pred_check_branch
          %2338 = sbr.rel (%p2336) target = $region80
        $region79: #{rd_model_forward.2} parent=75 // pred_region
          %p2339 = scmp.lt.s32.totalorder %s30, 1
          %s2340 = scalar_select %p2339, %s30, 1
          %s2341 = smul.addr %s2340, 8
          %s2342 = scalar_lea.vmem %s7, %s2341
        $region80: #{rd_model_forward.2} parent=75 // pred_fallthru
          _
      $region76: #{rd_model_forward.2} parent=5 // pred_fallthru
        _
    $region6: #{rd_model_forward.2} parent=1 // loop_footer
      %s23 = sadd.s32 1, %s19
    $region7: #{rd_model_forward.2} parent=1 // loop_footer_branch
      %18 = sbr.rel target = $region3
    $region8: #{rd_model_forward.2} parent=1 // loop_exit
      _
    %2343 = vsyncpa [#allocation4], 1
    %s2344 = scalar_lea.sflag [#allocation4], 1
    %2345 = vsyncpa %s2344, 1
    %2346 = vsyncpa [#allocation6], 1
    %s2347 = scalar_lea.sflag [#allocation6], 1
    %2348 = vsyncpa %s2347, 1

</llo_original>
